<compile_context>
chip_gen: v7x
topology: tpu7x:2x2x1
jax: 0.10.0
libtpu: 0.0.40
codegen_flags: <defaults>
</compile_context>

<pallas_src>
import functools

import jax
import jax.numpy as jnp
from jax.experimental import pallas as pl
from jax.experimental.pallas import tpu as pltpu


def _round_up(x, m):
    return ((x + m - 1) // m) * m


def _pick_tm(m, tm_default):
    """M tile: multiple of 16 (bf16 sublane packing); try to give the grid at
    least two M blocks so both TensorCores on dual-TC chips (v7x) get work."""
    mp16 = _round_up(m, 16)
    if mp16 >= 2 * tm_default:
        return tm_default
    if mp16 >= 128:
        return min(tm_default, _round_up((mp16 + 1) // 2, 16))
    return mp16


def _pick_tk(k, max_k):
    """Largest multiple-of-128 divisor of K that is <= max_k (K % 128 == 0)."""
    units = k // 128
    best = 1
    for d in range(1, units + 1):
        if units % d == 0 and d * 128 <= max_k:
            best = d
    return best * 128


# -----------------------------------------------------------------------------
# Kernels
# -----------------------------------------------------------------------------
def _gemm_kernel(x_ref, w_ref, shift_ref, o_ref, *, relu):
    """Single-K-block GEMM: o = act(x @ w + shift); no accumulator round trip."""
    y = jnp.dot(x_ref[...], w_ref[...], preferred_element_type=jnp.float32)
    y = y + shift_ref[...]
    if relu:
        y = jnp.maximum(y, 0.0)
    o_ref[...] = y.astype(o_ref.dtype)


def _gemm_acc_kernel(x_ref, w_ref, shift_ref, o_ref, acc_ref, *, relu):
    """K-tiled fallback with f32 VMEM accumulator (K grid axis innermost)."""
    k = pl.program_id(2)

    @pl.when(k == 0)
    def _():
        acc_ref[...] = jnp.zeros_like(acc_ref)

    acc_ref[...] += jnp.dot(x_ref[...], w_ref[...],
                            preferred_element_type=jnp.float32)

    @pl.when(k == pl.num_programs(2) - 1)
    def _():
        y = acc_ref[...] + shift_ref[...]
        if relu:
            y = jnp.maximum(y, 0.0)
        o_ref[...] = y.astype(o_ref.dtype)


def _dual_gemm_relu_kernel(a_ref, b_ref, wa_ref, wb_ref, shift_ref, o_ref):
    """conv-c + shortcut + residual add + final ReLU in one epilogue:
       o = relu(a @ wa + b @ wb + shift)."""
    y = jnp.dot(a_ref[...], wa_ref[...], preferred_element_type=jnp.float32)
    y = y + jnp.dot(b_ref[...], wb_ref[...], preferred_element_type=jnp.float32)
    y = jnp.maximum(y + shift_ref[...], 0.0)
    o_ref[...] = y.astype(o_ref.dtype)


# -----------------------------------------------------------------------------
# Pallas wrappers
# -----------------------------------------------------------------------------
def fused_gemm(x, w, shift, *, relu, out_dtype, tm=512, tn=256, max_k_block=2048):
    """act(x @ w + shift).  x: (M, K) bf16; w: (K, N) bf16 with BN scale already
    folded in; shift: (1, N) f32.  K, N must be pre-padded multiples of 128."""
    m, k = x.shape
    kw_, n = w.shape
    assert k == kw_ and k % 128 == 0 and n % 128 == 0
    assert shift.shape == (1, n)

    tn = min(tn, n)
    tm = _pick_tm(m, tm)
    mp = _round_up(m, tm)
    xp = x if mp == m else jnp.pad(x, ((0, mp - m), (0, 0)))

    if k <= max_k_block:
        # Single K block: no accumulator; full-K weight tile stays VMEM-resident
        # across the M loop (its block index never changes with i).
        out = pl.pallas_call(
            functools.partial(_gemm_kernel, relu=relu),
            out_shape=jax.ShapeDtypeStruct((mp, n), out_dtype),
            grid=(mp // tm, n // tn),
            in_specs=[
                pl.BlockSpec((tm, k), lambda i, j: (i, 0)),
                pl.BlockSpec((k, tn), lambda i, j: (0, j)),
                pl.BlockSpec((1, tn), lambda i, j: (0, j)),
            ],
            out_specs=pl.BlockSpec((tm, tn), lambda i, j: (i, j)),
            compiler_params=pltpu.CompilerParams(
                dimension_semantics=("parallel", "parallel")),
        )(xp, w, shift)
    else:
        tk = _pick_tk(k, max_k_block)
        out = pl.pallas_call(
            functools.partial(_gemm_acc_kernel, relu=relu),
            out_shape=jax.ShapeDtypeStruct((mp, n), out_dtype),
            grid=(mp // tm, n // tn, k // tk),
            in_specs=[
                pl.BlockSpec((tm, tk), lambda i, j, kk: (i, kk)),
                pl.BlockSpec((tk, tn), lambda i, j, kk: (kk, j)),
                pl.BlockSpec((1, tn), lambda i, j, kk: (0, j)),
            ],
            out_specs=pl.BlockSpec((tm, tn), lambda i, j, kk: (i, j)),
            scratch_shapes=[pltpu.VMEM((tm, tn), jnp.float32)],
            compiler_params=pltpu.CompilerParams(
                dimension_semantics=("parallel", "parallel", "arbitrary")),
        )(xp, w, shift)
    return out[:m]


def fused_dual_gemm(a, b, wa, wb, shift, *, out_dtype, tm=512, tn=256):
    """relu(a @ wa + b @ wb + shift): conv-c + shortcut + add + ReLU fused."""
    m, k1 = a.shape
    mb, k2 = b.shape
    assert m == mb
    _, n = wa.shape
    assert wa.shape == (k1, n) and wb.shape == (k2, n) and shift.shape == (1, n)
    assert k1 % 128 == 0 and k2 % 128 == 0 and n % 128 == 0

    tn = min(tn, n)
    tm = _pick_tm(m, tm)
    mp = _round_up(m, tm)
    ap = a if mp == m else jnp.pad(a, ((0, mp - m), (0, 0)))
    bp = b if mp == m else jnp.pad(b, ((0, mp - m), (0, 0)))

    out = pl.pallas_call(
        _dual_gemm_relu_kernel,
        out_shape=jax.ShapeDtypeStruct((mp, n), out_dtype),
        grid=(mp // tm, n // tn),
        in_specs=[
            pl.BlockSpec((tm, k1), lambda i, j: (i, 0)),
            pl.BlockSpec((tm, k2), lambda i, j: (i, 0)),
            pl.BlockSpec((k1, tn), lambda i, j: (0, j)),
            pl.BlockSpec((k2, tn), lambda i, j: (0, j)),
            pl.BlockSpec((1, tn), lambda i, j: (0, j)),
        ],
        out_specs=pl.BlockSpec((tm, tn), lambda i, j: (i, j)),
        compiler_params=pltpu.CompilerParams(
            dimension_semantics=("parallel", "parallel")),
    )(ap, bp, wa, wb, shift)
    return out[:m]


# -----------------------------------------------------------------------------
# Pure-JAX references (same padded bf16 inputs, same f32-accumulate numerics)
# -----------------------------------------------------------------------------
def ref_gemm(x, w, shift, *, relu, out_dtype, **_):
    y = jnp.dot(x, w, preferred_element_type=jnp.float32) + shift
    if relu:
        y = jnp.maximum(y, 0.0)
    return y.astype(out_dtype)


def ref_dual_gemm(a, b, wa, wb, shift, *, out_dtype, **_):
    y = (jnp.dot(a, wa, preferred_element_type=jnp.float32)
         + jnp.dot(b, wb, preferred_element_type=jnp.float32) + shift)
    return jnp.maximum(y, 0.0).astype(out_dtype)


# -----------------------------------------------------------------------------
# One-time parameter preparation: fold BN + bias, pre-pad, pre-cast to bf16
# -----------------------------------------------------------------------------
def _fold_bn(gamma, beta, mean, var, bias, eps):
    """Fold conv bias + inference BatchNorm into per-channel (scale, shift)."""
    scale = gamma / jnp.sqrt(var + eps)
    shift = beta + scale * (bias - mean)
    return scale, shift


def prepare_params(params, *, in_channels, kernel_size, eps=1e-5):
    """eps must match the source nn.BatchNorm2d eps (default 1e-5)."""
    k = kernel_size
    f1 = params["wa"].shape[1]
    f2 = params["wb"].shape[-1]
    f3 = params["wc"].shape[1]
    cin_p = _round_up(in_channels, 128)
    f1_p, f2_p, f3_p = (_round_up(f, 128) for f in (f1, f2, f3))

    sa, ba = _fold_bn(params["bn_a_gamma"], params["bn_a_beta"],
                      params["bn_a_mean"], params["bn_a_var"], params["ba"], eps)
    wa = jnp.pad(params["wa"] * sa[None, :],
                 ((0, cin_p - in_channels), (0, f1_p - f1))).astype(jnp.bfloat16)
    shift_a = jnp.pad(ba, (0, f1_p - f1)).astype(jnp.float32)[None, :]

    sb, bb = _fold_bn(params["bn_b_gamma"], params["bn_b_beta"],
                      params["bn_b_mean"], params["bn_b_var"], params["bb"], eps)
    wb = jnp.pad(params["wb"] * sb[None, None, None, :],
                 ((0, 0), (0, 0), (0, f1_p - f1), (0, f2_p - f2)))
    wb = wb.reshape(k * k * f1_p, f2_p).astype(jnp.bfloat16)
    shift_b = jnp.pad(bb, (0, f2_p - f2)).astype(jnp.float32)[None, :]

    sc, bc = _fold_bn(params["bn_c_gamma"], params["bn_c_beta"],
                      params["bn_c_mean"], params["bn_c_var"], params["bc"], eps)
    wc = jnp.pad(params["wc"] * sc[None, :],
                 ((0, f2_p - f2), (0, f3_p - f3))).astype(jnp.bfloat16)

    ss, bs = _fold_bn(params["bn_s_gamma"], params["bn_s_beta"],
                      params["bn_s_mean"], params["bn_s_var"], params["bs"], eps)
    ws = jnp.pad(params["ws"] * ss[None, :],
                 ((0, cin_p - in_channels), (0, f3_p - f3))).astype(jnp.bfloat16)

    # conv-c and the shortcut share one fused epilogue: shift_c + shift_s.
    shift_cs = (jnp.pad(bc, (0, f3_p - f3))
                + jnp.pad(bs, (0, f3_p - f3))).astype(jnp.float32)[None, :]

    return {"wa": wa, "shift_a": shift_a,
            "wb": wb, "shift_b": shift_b,
            "wc": wc, "ws": ws, "shift_cs": shift_cs}


# -----------------------------------------------------------------------------
# BottleneckBlock forward (v1_5, Conv2d path, inference BN)
# -----------------------------------------------------------------------------
def _im2col(y, ksize, stride, pad):
    """(N,H,W,C) -> (N,Ho,Wo,k*k*C) bf16 patches.  Tap order matches the
    (kh, kw, cin) row order of the prepared conv-b weight."""
    n, h, w, c = y.shape
    yp = jnp.pad(y, ((0, 0), (pad, pad), (pad, pad), (0, 0)))
    ho = (h + 2 * pad - ksize) // stride + 1
    wo = (w + 2 * pad - ksize) // stride + 1
    taps = [yp[:, kh:kh + stride * ho:stride, kw:kw + stride * wo:stride, :]
            for kh in range(ksize) for kw in range(ksize)]
    return jnp.concatenate(taps, axis=-1), ho, wo


def bottleneck_forward(x_nchw, prep, *, kernel_size, stride, out_channels,
                       use_pallas=True):
    gemm = fused_gemm if use_pallas else ref_gemm
    dual = fused_dual_gemm if use_pallas else ref_dual_gemm

    n, cin, h, w = x_nchw.shape
    cin_p, f1_p = prep["wa"].shape
    pad = (kernel_size - 1) // 2

    # NCHW -> NHWC, pad channels to a lane-dense multiple of 128, cast to bf16
    # (single XLA fusion; padded channel layout is kept until the final slice).
    x = jnp.transpose(x_nchw, (0, 2, 3, 1))
    x = jnp.pad(x, ((0, 0), (0, 0), (0, 0), (0, cin_p - cin))).astype(jnp.bfloat16)

    # a: 1x1 conv (stride 1 in v1.5) + BN + ReLU  -> bf16, padded channels.
    m1 = n * h * w
    y1 = gemm(x.reshape(m1, cin_p), prep["wa"], prep["shift_a"],
              relu=True, out_dtype=jnp.bfloat16)
    y1 = y1[:m1].reshape(n, h, w, f1_p)

    # b: kxk conv with stride + BN + ReLU (bf16 im2col -> GEMM).
    # TODO(synk): fold the k*k taps into the GEMM K grid axis (scalar-prefetch /
    # pl.Element index_map on y1) so patch tiles are DMA'd directly instead of
    # materializing the patch tensor in HBM.
    patches, ho, wo = _im2col(y1, kernel_size, stride, pad)
    m2 = n * ho * wo
    y2 = gemm(patches.reshape(m2, kernel_size * kernel_size * f1_p),
              prep["wb"], prep["shift_b"], relu=True, out_dtype=jnp.bfloat16)

    # shortcut input: strided spatial subsample of the already-padded bf16 x.
    xs = x[:, ::stride, ::stride, :]
    assert xs.shape[1] == ho and xs.shape[2] == wo
    xs = xs.reshape(m2, cin_p)

    # c + shortcut + residual add + final ReLU: one dual-GEMM kernel.
    y3 = dual(y2[:m2], xs, prep["wc"], prep["ws"], prep["shift_cs"],
              out_dtype=jnp.float32)

    out = y3[:m2, :out_channels].reshape(n, ho, wo, out_channels)
    return jnp.transpose(out, (0, 3, 1, 2))  # back to NCHW


# -----------------------------------------------------------------------------
# Parameter construction (kaiming weights, zero biases, generic BN stats)
# -----------------------------------------------------------------------------
def make_params(key, in_channels, kernel_size, filters):
    f1, f2, f3 = filters
    keys = iter(jax.random.split(key, 32))

    def kaiming(shape, fan_in):
        return jnp.sqrt(2.0 / fan_in) * jax.random.normal(next(keys), shape,
                                                          jnp.float32)

    p = {}
    p["wa"] = kaiming((in_channels, f1), in_channels)
    p["ba"] = jnp.zeros((f1,), jnp.float32)
    p["wb"] = kaiming((kernel_size, kernel_size, f1, f2),
                      kernel_size * kernel_size * f1)
    p["bb"] = jnp.zeros((f2,), jnp.float32)
    p["wc"] = kaiming((f2, f3), f2)
    p["bc"] = jnp.zeros((f3,), jnp.float32)
    p["ws"] = kaiming((in_channels, f3), in_channels)
    p["bs"] = jnp.zeros((f3,), jnp.float32)

    def bn(prefix, c):
        p[prefix + "_gamma"] = jax.random.uniform(next(keys), (c,), jnp.float32,
                                                  0.5, 1.5)
        p[prefix + "_beta"] = 0.1 * jax.random.normal(next(keys), (c,), jnp.float32)
        p[prefix + "_mean"] = 0.1 * jax.random.normal(next(keys), (c,), jnp.float32)
        p[prefix + "_var"] = jax.random.uniform(next(keys), (c,), jnp.float32,
                                                0.5, 1.5)

    bn("bn_a", f1)
    bn("bn_b", f2)
    bn("bn_c", f3)
    bn("bn_s", f3)
    return p


# -----------------------------------------------------------------------------
if __name__ == "__main__":
    key = jax.random.PRNGKey(0)
    kp, kx = jax.random.split(key)

    batch, in_channels, H, W = 2, 8, 16, 16
    kernel_size, stride = 3, 2
    filters = (8, 8, 32)

    params = make_params(kp, in_channels, kernel_size, filters)
    prep = prepare_params(params, in_channels=in_channels,
                          kernel_size=kernel_size)
    x = jax.random.normal(kx, (batch, in_channels, H, W), jnp.float32)

    fwd = jax.jit(functools.partial(
        bottleneck_forward, kernel_size=kernel_size, stride=stride,
        out_channels=filters[2], use_pallas=True))
    fwd_ref = jax.jit(functools.partial(
        bottleneck_forward, kernel_size=kernel_size, stride=stride,
        out_channels=filters[2], use_pallas=False))

    out = jax.block_until_ready(fwd(x, prep))
    ref = jax.block_until_ready(fwd_ref(x, prep))

    assert out.shape == (batch, filters[2], H // stride, W // stride), out.shape
    assert bool(jnp.all(jnp.isfinite(out)))
    max_err = float(jnp.max(jnp.abs(out - ref)))
    assert max_err < 5e-2, f"max abs err vs reference: {max_err}"

    print("KERNEL_OK")
</pallas_src>

<mosaic_0001>
module attributes {stable_mosaic.version = 11 : i64} {
  func.func @_gemm_kernel(%arg0: i32, %arg1: i32, %arg2: memref<256x128xbf16, #tpu.memory_space<vmem>>, %arg3: memref<128x128xbf16, #tpu.memory_space<vmem>>, %arg4: memref<1x128xf32, #tpu.memory_space<vmem>>, %arg5: memref<256x128xbf16, #tpu.memory_space<vmem>>) attributes {dimension_semantics = [#tpu.dimension_semantics<parallel>, #tpu.dimension_semantics<parallel>], iteration_bounds = array<i64: 2, 1>, scalar_prefetch = 0 : i64, scratch_operands = 0 : i64, tpu.core_type = #tpu.core_type<tc>, window_params = [{transform_indices = @transform_0, window_bounds = array<i64: 256, 128>}, {transform_indices = @transform_1, window_bounds = array<i64: 128, 128>}, {transform_indices = @transform_2, window_bounds = array<i64: 1, 128>}, {transform_indices = @transform_3, window_bounds = array<i64: 256, 128>}]} {
    %c0 = arith.constant 0 : index
    %c0_0 = arith.constant 0 : index
    %0 = vector.load %arg2[%c0, %c0_0] : memref<256x128xbf16, #tpu.memory_space<vmem>>, vector<256x128xbf16>
    %c0_1 = arith.constant 0 : index
    %c0_2 = arith.constant 0 : index
    %1 = vector.load %arg3[%c0_1, %c0_2] : memref<128x128xbf16, #tpu.memory_space<vmem>>, vector<128x128xbf16>
    %cst = arith.constant dense<0.000000e+00> : vector<256x128xf32>
    %2 = tpu.matmul %0, %1, %cst {dimension_numbers = #tpu.dot_dimension_numbers<[1], [0], [0], [1], [0, 0, 1, 1], [], []>} : vector<256x128xbf16>, vector<128x128xbf16>, vector<256x128xf32> -> vector<256x128xf32>
    %c0_3 = arith.constant 0 : index
    %c0_4 = arith.constant 0 : index
    %3 = vector.load %arg4[%c0_3, %c0_4] : memref<1x128xf32, #tpu.memory_space<vmem>>, vector<1x128xf32>
    %4 = vector.broadcast %3 : vector<1x128xf32> to vector<256x128xf32>
    %5 = arith.addf %2, %4 : vector<256x128xf32>
    %cst_5 = arith.constant 0.000000e+00 : f32
    %6 = vector.broadcast %cst_5 : f32 to vector<256x128xf32>
    %7 = arith.maximumf %5, %6 : vector<256x128xf32>
    %8 = arith.truncf %7 : vector<256x128xf32> to vector<256x128xbf16>
    %c0_6 = arith.constant 0 : index
    %c0_7 = arith.constant 0 : index
    %9 = vector.load %arg5[%c0_6, %c0_7] : memref<256x128xbf16, #tpu.memory_space<vmem>>, vector<256x128xbf16>
    tpu.vector_store %arg5[%c0_6, %c0_7], %8 {strides = array<i32>} : memref<256x128xbf16, #tpu.memory_space<vmem>>, vector<256x128xbf16>,
    return
  }
  func.func @transform_0(%arg0: i32, %arg1: i32) -> (i32, i32) {
    %c0_i32 = arith.constant 0 : i32
    %c0_i32_0 = arith.constant 0 : i32
    return %arg0, %c0_i32 : i32, i32
  }
  func.func @transform_1(%arg0: i32, %arg1: i32) -> (i32, i32) {
    %c0_i32 = arith.constant 0 : i32
    %c0_i32_0 = arith.constant 0 : i32
    return %c0_i32, %arg1 : i32, i32
  }
  func.func @transform_2(%arg0: i32, %arg1: i32) -> (i32, i32) {
    %c0_i32 = arith.constant 0 : i32
    %c0_i32_0 = arith.constant 0 : i32
    return %c0_i32, %arg1 : i32, i32
  }
  func.func @transform_3(%arg0: i32, %arg1: i32) -> (i32, i32) {
    %c0_i32 = arith.constant 0 : i32
    return %arg0, %arg1 : i32, i32
  }
}

module attributes {stable_mosaic.version = 11 : i64} {
  func.func @_dual_gemm_relu_kernel(%arg0: i32, %arg1: i32, %arg2: memref<64x128xbf16, #tpu.memory_space<vmem>>, %arg3: memref<64x128xbf16, #tpu.memory_space<vmem>>, %arg4: memref<128x128xbf16, #tpu.memory_space<vmem>>, %arg5: memref<128x128xbf16, #tpu.memory_space<vmem>>, %arg6: memref<1x128xf32, #tpu.memory_space<vmem>>, %arg7: memref<64x128xf32, #tpu.memory_space<vmem>>) attributes {dimension_semantics = [#tpu.dimension_semantics<parallel>, #tpu.dimension_semantics<parallel>], iteration_bounds = array<i64: 2, 1>, scalar_prefetch = 0 : i64, scratch_operands = 0 : i64, tpu.core_type = #tpu.core_type<tc>, window_params = [{transform_indices = @transform_0, window_bounds = array<i64: 64, 128>}, {transform_indices = @transform_1, window_bounds = array<i64: 64, 128>}, {transform_indices = @transform_2, window_bounds = array<i64: 128, 128>}, {transform_indices = @transform_3, window_bounds = array<i64: 128, 128>}, {transform_indices = @transform_4, window_bounds = array<i64: 1, 128>}, {transform_indices = @transform_5, window_bounds = array<i64: 64, 128>}]} {
    %c0 = arith.constant 0 : index
    %c0_0 = arith.constant 0 : index
    %0 = vector.load %arg2[%c0, %c0_0] : memref<64x128xbf16, #tpu.memory_space<vmem>>, vector<64x128xbf16>
    %c0_1 = arith.constant 0 : index
    %c0_2 = arith.constant 0 : index
    %1 = vector.load %arg4[%c0_1, %c0_2] : memref<128x128xbf16, #tpu.memory_space<vmem>>, vector<128x128xbf16>
    %cst = arith.constant dense<0.000000e+00> : vector<64x128xf32>
    %2 = tpu.matmul %0, %1, %cst {dimension_numbers = #tpu.dot_dimension_numbers<[1], [0], [0], [1], [0, 0, 1, 1], [], []>} : vector<64x128xbf16>, vector<128x128xbf16>, vector<64x128xf32> -> vector<64x128xf32>
    %c0_3 = arith.constant 0 : index
    %c0_4 = arith.constant 0 : index
    %3 = vector.load %arg3[%c0_3, %c0_4] : memref<64x128xbf16, #tpu.memory_space<vmem>>, vector<64x128xbf16>
    %c0_5 = arith.constant 0 : index
    %c0_6 = arith.constant 0 : index
    %4 = vector.load %arg5[%c0_5, %c0_6] : memref<128x128xbf16, #tpu.memory_space<vmem>>, vector<128x128xbf16>
    %cst_7 = arith.constant dense<0.000000e+00> : vector<64x128xf32>
    %5 = tpu.matmul %3, %4, %cst_7 {dimension_numbers = #tpu.dot_dimension_numbers<[1], [0], [0], [1], [0, 0, 1, 1], [], []>} : vector<64x128xbf16>, vector<128x128xbf16>, vector<64x128xf32> -> vector<64x128xf32>
    %6 = arith.addf %2, %5 : vector<64x128xf32>
    %c0_8 = arith.constant 0 : index
    %c0_9 = arith.constant 0 : index
    %7 = vector.load %arg6[%c0_8, %c0_9] : memref<1x128xf32, #tpu.memory_space<vmem>>, vector<1x128xf32>
    %8 = vector.broadcast %7 : vector<1x128xf32> to vector<64x128xf32>
    %9 = arith.addf %6, %8 : vector<64x128xf32>
    %cst_10 = arith.constant 0.000000e+00 : f32
    %10 = vector.broadcast %cst_10 : f32 to vector<64x128xf32>
    %11 = arith.maximumf %9, %10 : vector<64x128xf32>
    %c0_11 = arith.constant 0 : index
    %c0_12 = arith.constant 0 : index
    %12 = vector.load %arg7[%c0_11, %c0_12] : memref<64x128xf32, #tpu.memory_space<vmem>>, vector<64x128xf32>
    tpu.vector_store %arg7[%c0_11, %c0_12], %11 {strides = array<i32>} : memref<64x128xf32, #tpu.memory_space<vmem>>, vector<64x128xf32>,
    return
  }
  func.func @transform_0(%arg0: i32, %arg1: i32) -> (i32, i32) {
    %c0_i32 = arith.constant 0 : i32
    %c0_i32_0 = arith.constant 0 : i32
    return %arg0, %c0_i32 : i32, i32
  }
  func.func @transform_1(%arg0: i32, %arg1: i32) -> (i32, i32) {
    %c0_i32 = arith.constant 0 : i32
    %c0_i32_0 = arith.constant 0 : i32
    return %arg0, %c0_i32 : i32, i32
  }
  func.func @transform_2(%arg0: i32, %arg1: i32) -> (i32, i32) {
    %c0_i32 = arith.constant 0 : i32
    %c0_i32_0 = arith.constant 0 : i32
    return %c0_i32, %arg1 : i32, i32
  }
  func.func @transform_3(%arg0: i32, %arg1: i32) -> (i32, i32) {
    %c0_i32 = arith.constant 0 : i32
    %c0_i32_0 = arith.constant 0 : i32
    return %c0_i32, %arg1 : i32, i32
  }
  func.func @transform_4(%arg0: i32, %arg1: i32) -> (i32, i32) {
    %c0_i32 = arith.constant 0 : i32
    %c0_i32_0 = arith.constant 0 : i32
    return %c0_i32, %arg1 : i32, i32
  }
  func.func @transform_5(%arg0: i32, %arg1: i32) -> (i32, i32) {
    %c0_i32 = arith.constant 0 : i32
    return %arg0, %arg1 : i32, i32
  }
}

module attributes {stable_mosaic.version = 11 : i64} {
  func.func @_gemm_kernel(%arg0: i32, %arg1: i32, %arg2: memref<64x1152xbf16, #tpu.memory_space<vmem>>, %arg3: memref<1152x128xbf16, #tpu.memory_space<vmem>>, %arg4: memref<1x128xf32, #tpu.memory_space<vmem>>, %arg5: memref<64x128xbf16, #tpu.memory_space<vmem>>) attributes {dimension_semantics = [#tpu.dimension_semantics<parallel>, #tpu.dimension_semantics<parallel>], iteration_bounds = array<i64: 2, 1>, scalar_prefetch = 0 : i64, scratch_operands = 0 : i64, tpu.core_type = #tpu.core_type<tc>, window_params = [{transform_indices = @transform_0, window_bounds = array<i64: 64, 1152>}, {transform_indices = @transform_1, window_bounds = array<i64: 1152, 128>}, {transform_indices = @transform_2, window_bounds = array<i64: 1, 128>}, {transform_indices = @transform_3, window_bounds = array<i64: 64, 128>}]} {
    %c0 = arith.constant 0 : index
    %c0_0 = arith.constant 0 : index
    %0 = vector.load %arg2[%c0, %c0_0] : memref<64x1152xbf16, #tpu.memory_space<vmem>>, vector<64x1152xbf16>
    %c0_1 = arith.constant 0 : index
    %c0_2 = arith.constant 0 : index
    %1 = vector.load %arg3[%c0_1, %c0_2] : memref<1152x128xbf16, #tpu.memory_space<vmem>>, vector<1152x128xbf16>
    %cst = arith.constant dense<0.000000e+00> : vector<64x128xf32>
    %2 = tpu.matmul %0, %1, %cst {dimension_numbers = #tpu.dot_dimension_numbers<[1], [0], [0], [1], [0, 0, 1, 1], [], []>} : vector<64x1152xbf16>, vector<1152x128xbf16>, vector<64x128xf32> -> vector<64x128xf32>
    %c0_3 = arith.constant 0 : index
    %c0_4 = arith.constant 0 : index
    %3 = vector.load %arg4[%c0_3, %c0_4] : memref<1x128xf32, #tpu.memory_space<vmem>>, vector<1x128xf32>
    %4 = vector.broadcast %3 : vector<1x128xf32> to vector<64x128xf32>
    %5 = arith.addf %2, %4 : vector<64x128xf32>
    %cst_5 = arith.constant 0.000000e+00 : f32
    %6 = vector.broadcast %cst_5 : f32 to vector<64x128xf32>
    %7 = arith.maximumf %5, %6 : vector<64x128xf32>
    %8 = arith.truncf %7 : vector<64x128xf32> to vector<64x128xbf16>
    %c0_6 = arith.constant 0 : index
    %c0_7 = arith.constant 0 : index
    %9 = vector.load %arg5[%c0_6, %c0_7] : memref<64x128xbf16, #tpu.memory_space<vmem>>, vector<64x128xbf16>
    tpu.vector_store %arg5[%c0_6, %c0_7], %8 {strides = array<i32>} : memref<64x128xbf16, #tpu.memory_space<vmem>>, vector<64x128xbf16>,
    return
  }
  func.func @transform_0(%arg0: i32, %arg1: i32) -> (i32, i32) {
    %c0_i32 = arith.constant 0 : i32
    %c0_i32_0 = arith.constant 0 : i32
    return %arg0, %c0_i32 : i32, i32
  }
  func.func @transform_1(%arg0: i32, %arg1: i32) -> (i32, i32) {
    %c0_i32 = arith.constant 0 : i32
    %c0_i32_0 = arith.constant 0 : i32
    return %c0_i32, %arg1 : i32, i32
  }
  func.func @transform_2(%arg0: i32, %arg1: i32) -> (i32, i32) {
    %c0_i32 = arith.constant 0 : i32
    %c0_i32_0 = arith.constant 0 : i32
    return %c0_i32, %arg1 : i32, i32
  }
  func.func @transform_3(%arg0: i32, %arg1: i32) -> (i32, i32) {
    %c0_i32 = arith.constant 0 : i32
    return %arg0, %arg1 : i32, i32
  }
}

</mosaic_0001>

<llo_original>
// kernel: bottleneck_forward.3
$region0: #{bottleneck_forward.3}
  #allocation0 [shape = 'u32[]', space=smem, size = 0x4, offset = 0x4, fixed_abs, tag = 'smem constant byte address 0x4 - core index']
  #allocation1 [shape = 'u32[144,128]{1,0:T(1,128)}', space=vmem, size = 0x12000, scoped, tag = 'internal scratch']
  %s0 = inlined_call_operand.vmem [shape: bf16[512,128], index: 0, kind: input, shape index: {}]
  %s1 = inlined_call_operand.vmem [shape: bf16[128,128], index: 1, kind: input, shape index: {}]
  %s2 = inlined_call_operand.vmem [shape: f32[1,128], index: 2, kind: input, shape index: {}]
  %s3 = inlined_call_operand.vmem [shape: bf16[512,128], index: 3, kind: output, shape index: {}]
  %s4 = sld [smem:[#allocation0]]
  $region45: #{bottleneck_forward.3} parent=0
    _
  %s6 = ssub.s32 1, %s4
  %s7 = scalar_select 0, %s6, %s4
  loop: start=0, step=1, limit=4
  $region2: #{bottleneck_forward.3} parent=0 // loop_pre_header
    _
  $region3: #{bottleneck_forward.3} parent=0 // loop_header
    %s9 = sphi 0, %s13
    %p10 = scmp.ge.s32.totalorder %s9, 4
    %s16 = sphi 0, %s28
    %s17 = sphi 0, %s24
    %s18 = sphi 0, %s16
    %s19 = sphi 0, %s17
    %s20 = sphi 0, %s18
    %s21 = sphi 0, %s19
    %s31 = sphi 0, %s33
    %s34 = sphi 0, %s31
    %s35 = sphi 0, %s34
    %s51 = sphi 0, %s35
    %s57 = sphi 0, %s59
    %s60 = sphi 0, %s57
    %s61 = sphi 0, %s60
    %s77 = sphi 0, %s61
    %s83 = sphi 0, %s85
    %s86 = sphi 0, %s83
    %s87 = sphi 0, %s86
    %s103 = sphi 0, %s87
    %s111 = sphi 0, %s113
    %s114 = sphi 0, %s111
    %s115 = sphi 0, %s114
    %s131 = sphi 0, %s115
  $region4: #{bottleneck_forward.3} parent=0 // loop_header_branch
    %12 = sbr.rel (%p10) target = $region8
  $region5: #{bottleneck_forward.3} parent=0 // loop_body
    %s14 = ssub.s32 %s9, 1
    %s15 = ssub.s32 %s9, 2
    %s22 = sadd.s32 1, %s17
    %p23 = scmp.ge.s32.totalorder %s22, 1
    %s24 = scalar_select %p23, 0, %s22
    %s25 = sadd.s32 1, %s16
    %s26 = scalar_select %p23, %s25, %s16
    %p27 = scmp.ge.s32.totalorder %s26, 2
    %s28 = scalar_select %p27, 0, %s26
    %s29 = ssub.s32 %s16, %s28
    %p30 = scmp.eq.s32.totalorder %s29, 0
    %s32 = sadd.s32 %s31, 1
    %s33 = scalar_select %p30, %s31, %s32
    %p36 = pneg %p30
    %p37 = scmp.eq.s32.totalorder %s9, 1
    %p38 = por %p36, %p37
    %p39 = scmp.ne.s32.totalorder %s31, %s34
    %p40 = scmp.eq.s32.totalorder %s9, 0
    %p41 = por %p39, %p40
    %p42 = scmp.ne.s32.totalorder %s31, %s34
    %p43 = scmp.eq.s32.totalorder %s14, 1
    %p44 = por %p42, %p43
    %p45 = scmp.ne.s32.totalorder %s34, %s35
    %p46 = scmp.eq.s32.totalorder %s14, 0
    %p47 = por %p45, %p46
    %p48 = scmp.ne.s32.totalorder %s34, %s35
    %p49 = scmp.eq.s32.totalorder %s15, 1
    %p50 = por %p48, %p49
    %p52 = scmp.ne.s32.totalorder %s35, %s51
    %p53 = scmp.eq.s32.totalorder %s15, 0
    %p54 = por %p52, %p53
    %s55 = ssub.s32 %s17, %s24
    %p56 = scmp.eq.s32.totalorder %s55, 0
    %s58 = sadd.s32 %s57, 1
    %s59 = scalar_select %p56, %s57, %s58
    %p62 = pneg %p56
    %p63 = scmp.eq.s32.totalorder %s9, 1
    %p64 = por %p62, %p63
    %p65 = scmp.ne.s32.totalorder %s57, %s60
    %p66 = scmp.eq.s32.totalorder %s9, 0
    %p67 = por %p65, %p66
    %p68 = scmp.ne.s32.totalorder %s57, %s60
    %p69 = scmp.eq.s32.totalorder %s14, 1
    %p70 = por %p68, %p69
    %p71 = scmp.ne.s32.totalorder %s60, %s61
    %p72 = scmp.eq.s32.totalorder %s14, 0
    %p73 = por %p71, %p72
    %p74 = scmp.ne.s32.totalorder %s60, %s61
    %p75 = scmp.eq.s32.totalorder %s15, 1
    %p76 = por %p74, %p75
    %p78 = scmp.ne.s32.totalorder %s61, %s77
    %p79 = scmp.eq.s32.totalorder %s15, 0
    %p80 = por %p78, %p79
    %s81 = ssub.s32 %s17, %s24
    %p82 = scmp.eq.s32.totalorder %s81, 0
    %s84 = sadd.s32 %s83, 1
    %s85 = scalar_select %p82, %s83, %s84
    %p88 = pneg %p82
    %p89 = scmp.eq.s32.totalorder %s9, 1
    %p90 = por %p88, %p89
    %p91 = scmp.ne.s32.totalorder %s83, %s86
    %p92 = scmp.eq.s32.totalorder %s9, 0
    %p93 = por %p91, %p92
    %p94 = scmp.ne.s32.totalorder %s83, %s86
    %p95 = scmp.eq.s32.totalorder %s14, 1
    %p96 = por %p94, %p95
    %p97 = scmp.ne.s32.totalorder %s86, %s87
    %p98 = scmp.eq.s32.totalorder %s14, 0
    %p99 = por %p97, %p98
    %p100 = scmp.ne.s32.totalorder %s86, %s87
    %p101 = scmp.eq.s32.totalorder %s15, 1
    %p102 = por %p100, %p101
    %p104 = scmp.ne.s32.totalorder %s87, %s103
    %p105 = scmp.eq.s32.totalorder %s15, 0
    %p106 = por %p104, %p105
    %s107 = ssub.s32 %s16, %s28
    %s108 = ssub.s32 %s17, %s24
    %s109 = sor.u32 %s107, %s108
    %p110 = scmp.eq.s32.totalorder %s109, 0
    %s112 = sadd.s32 %s111, 1
    %s113 = scalar_select %p110, %s111, %s112
    %p116 = pneg %p110
    %p117 = scmp.eq.s32.totalorder %s9, 1
    %p118 = por %p116, %p117
    %p119 = scmp.ne.s32.totalorder %s111, %s114
    %p120 = scmp.eq.s32.totalorder %s9, 0
    %p121 = por %p119, %p120
    %p122 = scmp.ne.s32.totalorder %s111, %s114
    %p123 = scmp.eq.s32.totalorder %s14, 1
    %p124 = por %p122, %p123
    %p125 = scmp.ne.s32.totalorder %s114, %s115
    %p126 = scmp.eq.s32.totalorder %s14, 0
    %p127 = por %p125, %p126
    %p128 = scmp.ne.s32.totalorder %s114, %s115
    %p129 = scmp.eq.s32.totalorder %s15, 1
    %p130 = por %p128, %p129
    %p132 = scmp.ne.s32.totalorder %s115, %s131
    %p133 = scmp.eq.s32.totalorder %s15, 0
    %p134 = por %p132, %p133
    %p135 = scmp.le.s32.totalorder 1, %s9
    %p136 = scmp.lt.s32.totalorder %s9, 3
    %p137 = pnand %p135, %p136
    %p138 = pneg %p137
    // Predicated region
    $region9: #{bottleneck_forward.3} parent=5 // pred_check
      _
    $region10: #{bottleneck_forward.3} parent=5 // pred_check_branch
      %140 = sbr.rel (%p137) target = $region12
    $region11: #{bottleneck_forward.3} parent=5 // pred_region
      %s141 = ssub.s32 %s9, 1
      // Predicated region
      $region13: #{bottleneck_forward.3} parent=11 // pred_check
        %p142 = pneg %p73
      $region14: #{bottleneck_forward.3} parent=11 // pred_check_branch
        %144 = sbr.rel (%p142) target = $region16
      $region15: #{bottleneck_forward.3} parent=11 // pred_region
        %p145 = scmp.lt.s32.totalorder %s19, 0
        %s146 = scalar_select %p145, %s19, 0
        %s147 = smul.addr %s146, 4
        %s148 = scalar_lea.vmem %s1, %s147
      $region16: #{bottleneck_forward.3} parent=11 // pred_fallthru
        _
      // Predicated region
      $region17: #{bottleneck_forward.3} parent=11 // pred_check
        %p149 = pneg %p99
      $region18: #{bottleneck_forward.3} parent=11 // pred_check_branch
        %151 = sbr.rel (%p149) target = $region20
      $region19: #{bottleneck_forward.3} parent=11 // pred_region
        %p152 = scmp.lt.s32.totalorder %s19, 0
        %s153 = scalar_select %p152, %s19, 0
        %s154 = scalar_lea.vmem %s2, %s153
      $region20: #{bottleneck_forward.3} parent=11 // pred_fallthru
        _
    $region12: #{bottleneck_forward.3} parent=5 // pred_fallthru
      _
    %p155 = scmp.lt.s32.totalorder %s9, 2
    // Predicated region
    $region21: #{bottleneck_forward.3} parent=5 // pred_check
      %p156 = pneg %p155
    $region22: #{bottleneck_forward.3} parent=5 // pred_check_branch
      %158 = sbr.rel (%p156) target = $region24
    $region23: #{bottleneck_forward.3} parent=5 // pred_region
      // Predicated region
      $region25: #{bottleneck_forward.3} parent=23 // pred_check
        %p159 = pneg %p41
      $region26: #{bottleneck_forward.3} parent=23 // pred_check_branch
        %161 = sbr.rel (%p159) target = $region28
      $region27: #{bottleneck_forward.3} parent=23 // pred_region
        %s162 = smul.u32 32, %s16
        %p163 = scmp.lt.s32.totalorder %s162, 63
        %s164 = scalar_select %p163, %s162, 63
        %s165 = smul.addr %s164, 4
        %s166 = scalar_lea.vmem %s0, %s165
        %s167 = smul.u32 32, %s16
      $region28: #{bottleneck_forward.3} parent=23 // pred_fallthru
        _
    $region24: #{bottleneck_forward.3} parent=5 // pred_fallthru
      _
    %p168 = scmp.le.s32.totalorder 1, %s9
    %p169 = scmp.lt.s32.totalorder %s9, 3
    %p170 = pnand %p168, %p169
    %p171 = pneg %p170
    // Predicated region
    $region29: #{bottleneck_forward.3} parent=5 // pred_check
      _
    $region30: #{bottleneck_forward.3} parent=5 // pred_check_branch
      %173 = sbr.rel (%p170) target = $region32
    $region31: #{bottleneck_forward.3} parent=5 // pred_region
      %s174 = ssub.s32 %s9, 1
      %s175 = smul.u32 32, %s18
      %p176 = scmp.lt.s32.totalorder %s175, 63
      %s177 = scalar_select %p176, %s175, 63
      %s178 = smul.addr %s177, 4
      %s179 = scalar_lea.vmem %s0, %s178
      %p180 = pneg %p47
      %p181 = pneg %p44
      %p182 = scmp.lt.s32.totalorder %s19, 0
      %s183 = scalar_select %p182, %s19, 0
      %s184 = smul.addr %s183, 4
      %s185 = scalar_lea.vmem %s1, %s184
      %p186 = pneg %p73
      %p187 = pneg %p70
      %p188 = scmp.lt.s32.totalorder %s19, 0
      %s189 = scalar_select %p188, %s19, 0
      %s190 = scalar_lea.vmem %s2, %s189
      %p191 = pneg %p99
      %p192 = pneg %p96
      %p193 = pneg %p127
      %p194 = pneg %p124
      %s195 = smul.u32 32, %s18
      %p196 = scmp.lt.s32.totalorder %s195, 63
      %s197 = scalar_select %p196, %s195, 63
      %p198 = scmp.lt.s32.totalorder %s19, 0
      %s199 = scalar_select %p198, %s19, 0
      %s200 = sadd.s32 %s199, %s197
      %s201 = smul.addr %s200, 4
      %s202 = scalar_lea.vmem %s3, %s201
      %s203 = smul.u32 32, %s18
      %p204 = scmp.lt.s32.totalorder %s203, 63
      %s205 = scalar_select %p204, %s203, 63
      %s206 = smul.addr %s205, 4
      %s207 = scalar_lea.vmem %s0, %s206
      %s208 = smul.u32 32, %s18
      %p209 = scmp.lt.s32.totalorder %s19, 0
      %s210 = scalar_select %p209, %s19, 0
      %s211 = smul.addr %s210, 4
      %s212 = scalar_lea.vmem %s1, %s211
      %p213 = scmp.lt.s32.totalorder %s19, 0
      %s214 = scalar_select %p213, %s19, 0
      %s215 = scalar_lea.vmem %s2, %s214
      %s216 = smul.u32 32, %s18
      %p217 = scmp.lt.s32.totalorder %s216, 63
      %s218 = scalar_select %p217, %s216, 63
      %p219 = scmp.lt.s32.totalorder %s19, 0
      %s220 = scalar_select %p219, %s19, 0
      %s221 = sadd.s32 %s220, %s218
      %s222 = smul.addr %s221, 4
      %s223 = scalar_lea.vmem %s3, %s222
      %s224 = smul.u32 32, %s18
      %v226 = vld [vmem:[%s207] sm:$0xf]
      %v227 = vld [vmem:[%s207 + $0x4] sm:$0xf]
      %v228 = vld [vmem:[%s207 + $0x8] sm:$0xf]
      %v229 = vld [vmem:[%s207 + $0xc] sm:$0xf]
      %v230 = vld [vmem:[%s207 + $0x10] sm:$0xf]
      %v231 = vld [vmem:[%s207 + $0x14] sm:$0xf]
      %v232 = vld [vmem:[%s207 + $0x18] sm:$0xf]
      %v233 = vld [vmem:[%s207 + $0x1c] sm:$0xf]
      %v234 = vld [vmem:[%s207 + $0x20] sm:$0xf]
      %v235 = vld [vmem:[%s207 + $0x24] sm:$0xf]
      %v236 = vld [vmem:[%s207 + $0x28] sm:$0xf]
      %v237 = vld [vmem:[%s207 + $0x2c] sm:$0xf]
      %v238 = vld [vmem:[%s207 + $0x30] sm:$0xf]
      %v239 = vld [vmem:[%s207 + $0x34] sm:$0xf]
      %v240 = vld [vmem:[%s207 + $0x38] sm:$0xf]
      %v241 = vld [vmem:[%s207 + $0x3c] sm:$0xf]
      %v242 = vld [vmem:[%s207 + $0x40] sm:$0xf]
      %v243 = vld [vmem:[%s207 + $0x44] sm:$0xf]
      %v244 = vld [vmem:[%s207 + $0x48] sm:$0xf]
      %v245 = vld [vmem:[%s207 + $0x4c] sm:$0xf]
      %v246 = vld [vmem:[%s207 + $0x50] sm:$0xf]
      %v247 = vld [vmem:[%s207 + $0x54] sm:$0xf]
      %v248 = vld [vmem:[%s207 + $0x58] sm:$0xf]
      %v249 = vld [vmem:[%s207 + $0x5c] sm:$0xf]
      %v250 = vld [vmem:[%s207 + $0x60] sm:$0xf]
      %v251 = vld [vmem:[%s207 + $0x64] sm:$0xf]
      %v252 = vld [vmem:[%s207 + $0x68] sm:$0xf]
      %v253 = vld [vmem:[%s207 + $0x6c] sm:$0xf]
      %v254 = vld [vmem:[%s207 + $0x70] sm:$0xf]
      %v255 = vld [vmem:[%s207 + $0x74] sm:$0xf]
      %v256 = vld [vmem:[%s207 + $0x78] sm:$0xf]
      %v257 = vld [vmem:[%s207 + $0x7c] sm:$0xf]
      %v258 = vld [vmem:[%s212] sm:$0xf]
      %v259 = vld [vmem:[%s212 + $0x4] sm:$0xf]
      %v260 = vld [vmem:[%s212 + $0x8] sm:$0xf]
      %v261 = vld [vmem:[%s212 + $0xc] sm:$0xf]
      %v262 = vld [vmem:[%s212 + $0x10] sm:$0xf]
      %v263 = vld [vmem:[%s212 + $0x14] sm:$0xf]
      %v264 = vld [vmem:[%s212 + $0x18] sm:$0xf]
      %v265 = vld [vmem:[%s212 + $0x1c] sm:$0xf]
      %v266 = vld [vmem:[%s212 + $0x20] sm:$0xf]
      %v267 = vld [vmem:[%s212 + $0x24] sm:$0xf]
      %v268 = vld [vmem:[%s212 + $0x28] sm:$0xf]
      %v269 = vld [vmem:[%s212 + $0x2c] sm:$0xf]
      %v270 = vld [vmem:[%s212 + $0x30] sm:$0xf]
      %v271 = vld [vmem:[%s212 + $0x34] sm:$0xf]
      %v272 = vld [vmem:[%s212 + $0x38] sm:$0xf]
      %v273 = vld [vmem:[%s212 + $0x3c] sm:$0xf]
      %v274 = vld [vmem:[%s215] sm:$0x1]
      %v276 = vlaneseq
      %v277 = vshrl.u32 %v276, 7
      %v278 = vsub.s32 0, %v277
      %v279 = vrot.slane %v274, %v278
      %v313 = vunpack.c.l.b16 %v226
      %v314 = vunpack.c.l.b16 %v227
      %v315 = vunpack.c.l.b16 %v228
      %v316 = vunpack.c.l.b16 %v229
      %v317 = vunpack.c.l.b16 %v230
      %v318 = vunpack.c.l.b16 %v231
      %v319 = vunpack.c.l.b16 %v232
      %v320 = vunpack.c.l.b16 %v233
      %v321 = vunpack.c.l.b16 %v234
      %v322 = vunpack.c.l.b16 %v235
      %v323 = vunpack.c.l.b16 %v236
      %v324 = vunpack.c.l.b16 %v237
      %v325 = vunpack.c.l.b16 %v238
      %v326 = vunpack.c.l.b16 %v239
      %v327 = vunpack.c.l.b16 %v240
      %v328 = vunpack.c.l.b16 %v241
      %v329 = vunpack.c.l.b16 %v242
      %v330 = vunpack.c.l.b16 %v243
      %v331 = vunpack.c.l.b16 %v244
      %v332 = vunpack.c.l.b16 %v245
      %v333 = vunpack.c.l.b16 %v246
      %v334 = vunpack.c.l.b16 %v247
      %v335 = vunpack.c.l.b16 %v248
      %v336 = vunpack.c.l.b16 %v249
      %v337 = vunpack.c.l.b16 %v250
      %v338 = vunpack.c.l.b16 %v251
      %v339 = vunpack.c.l.b16 %v252
      %v340 = vunpack.c.l.b16 %v253
      %v341 = vunpack.c.l.b16 %v254
      %v342 = vunpack.c.l.b16 %v255
      %v343 = vunpack.c.l.b16 %v256
      %v344 = vunpack.c.l.b16 %v257
      %v345 = vpack.c.b16 %v314, %v313
      %v346 = vpack.c.b16 %v316, %v315
      %v347 = vpack.c.b16 %v318, %v317
      %v348 = vpack.c.b16 %v320, %v319
      %v349 = vpack.c.b16 %v322, %v321
      %v350 = vpack.c.b16 %v324, %v323
      %v351 = vpack.c.b16 %v326, %v325
      %v352 = vpack.c.b16 %v328, %v327
      %v353 = vpack.c.b16 %v330, %v329
      %v354 = vpack.c.b16 %v332, %v331
      %v355 = vpack.c.b16 %v334, %v333
      %v356 = vpack.c.b16 %v336, %v335
      %v357 = vpack.c.b16 %v338, %v337
      %v358 = vpack.c.b16 %v340, %v339
      %v359 = vpack.c.b16 %v342, %v341
      %v360 = vpack.c.b16 %v344, %v343
      %v393 = vunpack.c.l.b16 %v258
      %v394 = vunpack.c.l.b16 %v259
      %v395 = vunpack.c.l.b16 %v260
      %v396 = vunpack.c.l.b16 %v261
      %v397 = vunpack.c.l.b16 %v262
      %v398 = vunpack.c.l.b16 %v263
      %v399 = vunpack.c.l.b16 %v264
      %v400 = vunpack.c.l.b16 %v265
      %v401 = vunpack.c.l.b16 %v266
      %v402 = vunpack.c.l.b16 %v267
      %v403 = vunpack.c.l.b16 %v268
      %v404 = vunpack.c.l.b16 %v269
      %v405 = vunpack.c.l.b16 %v270
      %v406 = vunpack.c.l.b16 %v271
      %v407 = vunpack.c.l.b16 %v272
      %v408 = vunpack.c.l.b16 %v273
      %v409 = vpack.c.b16 %v394, %v393
      %v410 = vpack.c.b16 %v396, %v395
      %v411 = vpack.c.b16 %v398, %v397
      %v412 = vpack.c.b16 %v400, %v399
      %v413 = vpack.c.b16 %v402, %v401
      %v414 = vpack.c.b16 %v404, %v403
      %v415 = vpack.c.b16 %v406, %v405
      %v416 = vpack.c.b16 %v408, %v407
      %425 = vmatprep.subr.bf16.mxu0 0
      %426 = vmatpush1.bf16.msra.mxu0 %v409
      %427 = vmatprep.subr.bf16.mxu0 0
      %428 = vmatpush1.bf16.msra.mxu0 %v410
      %429 = vmatprep.subr.bf16.mxu0 0
      %430 = vmatpush1.bf16.msra.mxu0 %v411
      %431 = vmatprep.subr.bf16.mxu0 0
      %432 = vmatpush1.bf16.msra.mxu0 %v412
      %433 = vmatprep.subr.bf16.mxu0 0
      %434 = vmatpush1.bf16.msra.mxu0 %v413
      %435 = vmatprep.subr.bf16.mxu0 0
      %436 = vmatpush1.bf16.msra.mxu0 %v414
      %437 = vmatprep.subr.bf16.mxu0 0
      %438 = vmatpush1.bf16.msra.mxu0 %v415
      %439 = vmatprep.subr.bf16.mxu0 0
      %440 = vmatpush1.bf16.msra.mxu0 %v416
      %441 = vmatprep.subr.bf16.mxu0 0
      %442 = vmatpush1.bf16.msra.mxu0 0
      %443 = vmatprep.subr.bf16.mxu0 0
      %444 = vmatpush1.bf16.msra.mxu0 0
      %445 = vmatprep.subr.bf16.mxu0 0
      %446 = vmatpush1.bf16.msra.mxu0 0
      %447 = vmatprep.subr.bf16.mxu0 0
      %448 = vmatpush1.bf16.msra.mxu0 0
      %449 = vmatprep.subr.bf16.mxu0 0
      %450 = vmatpush1.bf16.msra.mxu0 0
      %451 = vmatprep.subr.bf16.mxu0 0
      %452 = vmatpush1.bf16.msra.mxu0 0
      %453 = vmatprep.subr.bf16.mxu0 0
      %454 = vmatpush1.bf16.msra.mxu0 0
      %455 = vmatprep.subr.bf16.mxu0 0
      %456 = vmatpush1.bf16.msra.mxu0 0
      %457 = vmatprep.mubr.bf16.mxu0 0
      %458 = vmatmul.mubr.bf16.gmra.mrb[0].mxu0 %v345
      %v459 = vpop.f32.mrb[0].mxu0
      %v460 = vadd.f32 %v279, %v459
      %v461 = vpop.f32.mrb[0].mxu0
      %v462 = vpop.f32.mrb[0].mxu0
      %v463 = vadd.f32 %v279, %v462
      %v464 = vpop.f32.mrb[0].mxu0
      %465 = vmatprep.mubr.bf16.mxu0 0
      %466 = vmatmul.mubr.bf16.gmra.mrb[0].mxu0 %v346
      %v467 = vpop.f32.mrb[0].mxu0
      %v468 = vadd.f32 %v279, %v467
      %v469 = vpop.f32.mrb[0].mxu0
      %v470 = vpop.f32.mrb[0].mxu0
      %v471 = vadd.f32 %v279, %v470
      %v472 = vpop.f32.mrb[0].mxu0
      %473 = vmatprep.mubr.bf16.mxu0 0
      %474 = vmatmul.mubr.bf16.gmra.mrb[0].mxu0 %v347
      %v475 = vpop.f32.mrb[0].mxu0
      %v476 = vadd.f32 %v279, %v475
      %v477 = vpop.f32.mrb[0].mxu0
      %v478 = vpop.f32.mrb[0].mxu0
      %v479 = vadd.f32 %v279, %v478
      %v480 = vpop.f32.mrb[0].mxu0
      %481 = vmatprep.mubr.bf16.mxu0 0
      %482 = vmatmul.mubr.bf16.gmra.mrb[0].mxu0 %v348
      %v483 = vpop.f32.mrb[0].mxu0
      %v484 = vadd.f32 %v279, %v483
      %v485 = vpop.f32.mrb[0].mxu0
      %v486 = vpop.f32.mrb[0].mxu0
      %v487 = vadd.f32 %v279, %v486
      %v488 = vpop.f32.mrb[0].mxu0
      %489 = vmatprep.mubr.bf16.mxu0 0
      %490 = vmatmul.mubr.bf16.gmra.mrb[0].mxu0 %v349
      %v491 = vpop.f32.mrb[0].mxu0
      %v492 = vadd.f32 %v279, %v491
      %v493 = vpop.f32.mrb[0].mxu0
      %v494 = vpop.f32.mrb[0].mxu0
      %v495 = vadd.f32 %v279, %v494
      %v496 = vpop.f32.mrb[0].mxu0
      %497 = vmatprep.mubr.bf16.mxu0 0
      %498 = vmatmul.mubr.bf16.gmra.mrb[0].mxu0 %v350
      %v499 = vpop.f32.mrb[0].mxu0
      %v500 = vadd.f32 %v279, %v499
      %v501 = vpop.f32.mrb[0].mxu0
      %v502 = vpop.f32.mrb[0].mxu0
      %v503 = vadd.f32 %v279, %v502
      %v504 = vpop.f32.mrb[0].mxu0
      %505 = vmatprep.mubr.bf16.mxu0 0
      %506 = vmatmul.mubr.bf16.gmra.mrb[0].mxu0 %v351
      %v507 = vpop.f32.mrb[0].mxu0
      %v508 = vadd.f32 %v279, %v507
      %v509 = vpop.f32.mrb[0].mxu0
      %v510 = vpop.f32.mrb[0].mxu0
      %v511 = vadd.f32 %v279, %v510
      %v512 = vpop.f32.mrb[0].mxu0
      %513 = vmatprep.mubr.bf16.mxu0 0
      %514 = vmatmul.mubr.bf16.gmra.mrb[0].mxu0 %v352
      %v515 = vpop.f32.mrb[0].mxu0
      %v516 = vadd.f32 %v279, %v515
      %v517 = vpop.f32.mrb[0].mxu0
      %v518 = vpop.f32.mrb[0].mxu0
      %v519 = vadd.f32 %v279, %v518
      %v520 = vpop.f32.mrb[0].mxu0
      %521 = vmatprep.mubr.bf16.mxu0 0
      %522 = vmatmul.mubr.bf16.gmra.mrb[0].mxu0 %v353
      %v523 = vpop.f32.mrb[0].mxu0
      %v524 = vadd.f32 %v279, %v523
      %v525 = vpop.f32.mrb[0].mxu0
      %v526 = vpop.f32.mrb[0].mxu0
      %v527 = vadd.f32 %v279, %v526
      %v528 = vpop.f32.mrb[0].mxu0
      %529 = vmatprep.mubr.bf16.mxu0 0
      %530 = vmatmul.mubr.bf16.gmra.mrb[0].mxu0 %v354
      %v531 = vpop.f32.mrb[0].mxu0
      %v532 = vadd.f32 %v279, %v531
      %v533 = vpop.f32.mrb[0].mxu0
      %v534 = vpop.f32.mrb[0].mxu0
      %v535 = vadd.f32 %v279, %v534
      %v536 = vpop.f32.mrb[0].mxu0
      %537 = vmatprep.mubr.bf16.mxu0 0
      %538 = vmatmul.mubr.bf16.gmra.mrb[0].mxu0 %v355
      %v539 = vpop.f32.mrb[0].mxu0
      %v540 = vadd.f32 %v279, %v539
      %v541 = vpop.f32.mrb[0].mxu0
      %v542 = vpop.f32.mrb[0].mxu0
      %v543 = vadd.f32 %v279, %v542
      %v544 = vpop.f32.mrb[0].mxu0
      %545 = vmatprep.mubr.bf16.mxu0 0
      %546 = vmatmul.mubr.bf16.gmra.mrb[0].mxu0 %v356
      %v547 = vpop.f32.mrb[0].mxu0
      %v548 = vadd.f32 %v279, %v547
      %v549 = vpop.f32.mrb[0].mxu0
      %v550 = vpop.f32.mrb[0].mxu0
      %v551 = vadd.f32 %v279, %v550
      %v552 = vpop.f32.mrb[0].mxu0
      %553 = vmatprep.mubr.bf16.mxu0 0
      %554 = vmatmul.mubr.bf16.gmra.mrb[0].mxu0 %v357
      %v555 = vpop.f32.mrb[0].mxu0
      %v556 = vadd.f32 %v279, %v555
      %v557 = vpop.f32.mrb[0].mxu0
      %v558 = vpop.f32.mrb[0].mxu0
      %v559 = vadd.f32 %v279, %v558
      %v560 = vpop.f32.mrb[0].mxu0
      %561 = vmatprep.mubr.bf16.mxu0 0
      %562 = vmatmul.mubr.bf16.gmra.mrb[0].mxu0 %v358
      %v563 = vpop.f32.mrb[0].mxu0
      %v564 = vadd.f32 %v279, %v563
      %v565 = vpop.f32.mrb[0].mxu0
      %v566 = vpop.f32.mrb[0].mxu0
      %v567 = vadd.f32 %v279, %v566
      %v568 = vpop.f32.mrb[0].mxu0
      %569 = vmatprep.mubr.bf16.mxu0 0
      %570 = vmatmul.mubr.bf16.gmra.mrb[0].mxu0 %v359
      %v571 = vpop.f32.mrb[0].mxu0
      %v572 = vadd.f32 %v279, %v571
      %v573 = vpop.f32.mrb[0].mxu0
      %v574 = vpop.f32.mrb[0].mxu0
      %v575 = vadd.f32 %v279, %v574
      %v576 = vpop.f32.mrb[0].mxu0
      %577 = vmatprep.mubr.bf16.mxu0 0
      %578 = vmatmul.mubr.bf16.gmra.mrb[0].mxu0 %v360
      %v579 = vpop.f32.mrb[0].mxu0
      %v580 = vadd.f32 %v279, %v579
      %v581 = vpop.f32.mrb[0].mxu0
      %v582 = vpop.f32.mrb[0].mxu0
      %v583 = vadd.f32 %v279, %v582
      %v584 = vpop.f32.mrb[0].mxu0
      %585 = vdwg.mxu0
      %v586 = vmax.f32 %v460, 0.0
      %v587 = vmax.f32 %v463, 0.0
      %v588 = vmax.f32 %v468, 0.0
      %v589 = vmax.f32 %v471, 0.0
      %v590 = vmax.f32 %v476, 0.0
      %v591 = vmax.f32 %v479, 0.0
      %v592 = vmax.f32 %v484, 0.0
      %v593 = vmax.f32 %v487, 0.0
      %v594 = vmax.f32 %v492, 0.0
      %v595 = vmax.f32 %v495, 0.0
      %v596 = vmax.f32 %v500, 0.0
      %v597 = vmax.f32 %v503, 0.0
      %v598 = vmax.f32 %v508, 0.0
      %v599 = vmax.f32 %v511, 0.0
      %v600 = vmax.f32 %v516, 0.0
      %v601 = vmax.f32 %v519, 0.0
      %v602 = vmax.f32 %v524, 0.0
      %v603 = vmax.f32 %v527, 0.0
      %v604 = vmax.f32 %v532, 0.0
      %v605 = vmax.f32 %v535, 0.0
      %v606 = vmax.f32 %v540, 0.0
      %v607 = vmax.f32 %v543, 0.0
      %v608 = vmax.f32 %v548, 0.0
      %v609 = vmax.f32 %v551, 0.0
      %v610 = vmax.f32 %v556, 0.0
      %v611 = vmax.f32 %v559, 0.0
      %v612 = vmax.f32 %v564, 0.0
      %v613 = vmax.f32 %v567, 0.0
      %v614 = vmax.f32 %v572, 0.0
      %v615 = vmax.f32 %v575, 0.0
      %v616 = vmax.f32 %v580, 0.0
      %v617 = vmax.f32 %v583, 0.0
      %v618 = vpack.c.bf16 %v587, %v586
      %v619 = vpack.c.bf16 %v589, %v588
      %v620 = vpack.c.bf16 %v591, %v590
      %v621 = vpack.c.bf16 %v593, %v592
      %v622 = vpack.c.bf16 %v595, %v594
      %v623 = vpack.c.bf16 %v597, %v596
      %v624 = vpack.c.bf16 %v599, %v598
      %v625 = vpack.c.bf16 %v601, %v600
      %v626 = vpack.c.bf16 %v603, %v602
      %v627 = vpack.c.bf16 %v605, %v604
      %v628 = vpack.c.bf16 %v607, %v606
      %v629 = vpack.c.bf16 %v609, %v608
      %v630 = vpack.c.bf16 %v611, %v610
      %v631 = vpack.c.bf16 %v613, %v612
      %v632 = vpack.c.bf16 %v615, %v614
      %v633 = vpack.c.bf16 %v617, %v616
      %v650 = vunpack.c.l.b16 %v618
      %v651 = vunpack.c.h.b16 %v618
      %v652 = vunpack.c.l.b16 %v619
      %v653 = vunpack.c.h.b16 %v619
      %v654 = vunpack.c.l.b16 %v620
      %v655 = vunpack.c.h.b16 %v620
      %v656 = vunpack.c.l.b16 %v621
      %v657 = vunpack.c.h.b16 %v621
      %v658 = vunpack.c.l.b16 %v622
      %v659 = vunpack.c.h.b16 %v622
      %v660 = vunpack.c.l.b16 %v623
      %v661 = vunpack.c.h.b16 %v623
      %v662 = vunpack.c.l.b16 %v624
      %v663 = vunpack.c.h.b16 %v624
      %v664 = vunpack.c.l.b16 %v625
      %v665 = vunpack.c.h.b16 %v625
      %v666 = vunpack.c.l.b16 %v626
      %v667 = vunpack.c.h.b16 %v626
      %v668 = vunpack.c.l.b16 %v627
      %v669 = vunpack.c.h.b16 %v627
      %v670 = vunpack.c.l.b16 %v628
      %v671 = vunpack.c.h.b16 %v628
      %v672 = vunpack.c.l.b16 %v629
      %v673 = vunpack.c.h.b16 %v629
      %v674 = vunpack.c.l.b16 %v630
      %v675 = vunpack.c.h.b16 %v630
      %v676 = vunpack.c.l.b16 %v631
      %v677 = vunpack.c.h.b16 %v631
      %v678 = vunpack.c.l.b16 %v632
      %v679 = vunpack.c.h.b16 %v632
      %v680 = vunpack.c.l.b16 %v633
      %v681 = vunpack.c.h.b16 %v633
      %v682 = vpack.c.b16 %v650, %v650
      %v683 = vpack.c.b16 %v651, %v651
      %v684 = vpack.c.b16 %v652, %v652
      %v685 = vpack.c.b16 %v653, %v653
      %v686 = vpack.c.b16 %v654, %v654
      %v687 = vpack.c.b16 %v655, %v655
      %v688 = vpack.c.b16 %v656, %v656
      %v689 = vpack.c.b16 %v657, %v657
      %v690 = vpack.c.b16 %v658, %v658
      %v691 = vpack.c.b16 %v659, %v659
      %v692 = vpack.c.b16 %v660, %v660
      %v693 = vpack.c.b16 %v661, %v661
      %v694 = vpack.c.b16 %v662, %v662
      %v695 = vpack.c.b16 %v663, %v663
      %v696 = vpack.c.b16 %v664, %v664
      %v697 = vpack.c.b16 %v665, %v665
      %v698 = vpack.c.b16 %v666, %v666
      %v699 = vpack.c.b16 %v667, %v667
      %v700 = vpack.c.b16 %v668, %v668
      %v701 = vpack.c.b16 %v669, %v669
      %v702 = vpack.c.b16 %v670, %v670
      %v703 = vpack.c.b16 %v671, %v671
      %v704 = vpack.c.b16 %v672, %v672
      %v705 = vpack.c.b16 %v673, %v673
      %v706 = vpack.c.b16 %v674, %v674
      %v707 = vpack.c.b16 %v675, %v675
      %v708 = vpack.c.b16 %v676, %v676
      %v709 = vpack.c.b16 %v677, %v677
      %v710 = vpack.c.b16 %v678, %v678
      %v711 = vpack.c.b16 %v679, %v679
      %v712 = vpack.c.b16 %v680, %v680
      %v713 = vpack.c.b16 %v681, %v681
      %746 = vst [vmem:[%s223] sm:$0xf] %v682
      %747 = vst [vmem:[%s223 + $0x4] sm:$0xf] %v683
      %748 = vst [vmem:[%s223 + $0x8] sm:$0xf] %v684
      %749 = vst [vmem:[%s223 + $0xc] sm:$0xf] %v685
      %750 = vst [vmem:[%s223 + $0x10] sm:$0xf] %v686
      %751 = vst [vmem:[%s223 + $0x14] sm:$0xf] %v687
      %752 = vst [vmem:[%s223 + $0x18] sm:$0xf] %v688
      %753 = vst [vmem:[%s223 + $0x1c] sm:$0xf] %v689
      %754 = vst [vmem:[%s223 + $0x20] sm:$0xf] %v690
      %755 = vst [vmem:[%s223 + $0x24] sm:$0xf] %v691
      %756 = vst [vmem:[%s223 + $0x28] sm:$0xf] %v692
      %757 = vst [vmem:[%s223 + $0x2c] sm:$0xf] %v693
      %758 = vst [vmem:[%s223 + $0x30] sm:$0xf] %v694
      %759 = vst [vmem:[%s223 + $0x34] sm:$0xf] %v695
      %760 = vst [vmem:[%s223 + $0x38] sm:$0xf] %v696
      %761 = vst [vmem:[%s223 + $0x3c] sm:$0xf] %v697
      %762 = vst [vmem:[%s223 + $0x40] sm:$0xf] %v698
      %763 = vst [vmem:[%s223 + $0x44] sm:$0xf] %v699
      %764 = vst [vmem:[%s223 + $0x48] sm:$0xf] %v700
      %765 = vst [vmem:[%s223 + $0x4c] sm:$0xf] %v701
      %766 = vst [vmem:[%s223 + $0x50] sm:$0xf] %v702
      %767 = vst [vmem:[%s223 + $0x54] sm:$0xf] %v703
      %768 = vst [vmem:[%s223 + $0x58] sm:$0xf] %v704
      %769 = vst [vmem:[%s223 + $0x5c] sm:$0xf] %v705
      %770 = vst [vmem:[%s223 + $0x60] sm:$0xf] %v706
      %771 = vst [vmem:[%s223 + $0x64] sm:$0xf] %v707
      %772 = vst [vmem:[%s223 + $0x68] sm:$0xf] %v708
      %773 = vst [vmem:[%s223 + $0x6c] sm:$0xf] %v709
      %774 = vst [vmem:[%s223 + $0x70] sm:$0xf] %v710
      %775 = vst [vmem:[%s223 + $0x74] sm:$0xf] %v711
      %776 = vst [vmem:[%s223 + $0x78] sm:$0xf] %v712
      %777 = vst [vmem:[%s223 + $0x7c] sm:$0xf] %v713
      %s778 = smul.u32 32, %s18
      %p779 = scmp.lt.s32.totalorder %s778, 63
      %s780 = scalar_select %p779, %s778, 63
      %p781 = scmp.lt.s32.totalorder %s19, 0
      %s782 = scalar_select %p781, %s19, 0
      %s783 = sadd.s32 %s782, %s780
      %s784 = smul.addr %s783, 4
      %s785 = scalar_lea.vmem %s3, %s784
      // Predicated region
      $region33: #{bottleneck_forward.3} parent=31 // pred_check
        %p786 = pneg %p124
      $region34: #{bottleneck_forward.3} parent=31 // pred_check_branch
        %788 = sbr.rel (%p786) target = $region36
      $region35: #{bottleneck_forward.3} parent=31 // pred_region
        %s789 = smul.u32 32, %s18
      $region36: #{bottleneck_forward.3} parent=31 // pred_fallthru
        _
    $region32: #{bottleneck_forward.3} parent=5 // pred_fallthru
      _
    %p790 = scmp.le.s32.totalorder 2, %s9
    // Predicated region
    $region37: #{bottleneck_forward.3} parent=5 // pred_check
      %p791 = pneg %p790
    $region38: #{bottleneck_forward.3} parent=5 // pred_check_branch
      %793 = sbr.rel (%p791) target = $region40
    $region39: #{bottleneck_forward.3} parent=5 // pred_region
      %s794 = ssub.s32 %s9, 2
      // Predicated region
      $region41: #{bottleneck_forward.3} parent=39 // pred_check
        %p795 = pneg %p130
      $region42: #{bottleneck_forward.3} parent=39 // pred_check_branch
        %797 = sbr.rel (%p795) target = $region44
      $region43: #{bottleneck_forward.3} parent=39 // pred_region
        %s798 = smul.u32 32, %s20
        %p799 = scmp.lt.s32.totalorder %s798, 63
        %s800 = scalar_select %p799, %s798, 63
        %p801 = scmp.lt.s32.totalorder %s21, 0
        %s802 = scalar_select %p801, %s21, 0
        %s803 = sadd.s32 %s802, %s800
        %s804 = smul.addr %s803, 4
        %s805 = scalar_lea.vmem %s3, %s804
      $region44: #{bottleneck_forward.3} parent=39 // pred_fallthru
        _
    $region40: #{bottleneck_forward.3} parent=5 // pred_fallthru
      _
  $region6: #{bottleneck_forward.3} parent=0 // loop_footer
    %s13 = sadd.s32 1, %s9
  $region7: #{bottleneck_forward.3} parent=0 // loop_footer_branch
    %8 = sbr.rel target = $region3
  $region8: #{bottleneck_forward.3} parent=0 // loop_exit
    _

// kernel: bottleneck_forward.5
$region0: #{bottleneck_forward.5}
  #allocation0 [shape = 'u32[]', space=smem, size = 0x4, offset = 0x4, fixed_abs, tag = 'smem constant byte address 0x4 - core index']
  #allocation1 [shape = 'u32[144,128]{1,0:T(1,128)}', space=vmem, size = 0x12000, scoped, tag = 'internal scratch']
  %s0 = inlined_call_operand.vmem [shape: bf16[128,128], index: 0, kind: input, shape index: {}]
  %s1 = inlined_call_operand.vmem [shape: bf16[128,128], index: 1, kind: input, shape index: {}]
  %s2 = inlined_call_operand.vmem [shape: bf16[128,128], index: 2, kind: input, shape index: {}]
  %s3 = inlined_call_operand.vmem [shape: bf16[128,128], index: 3, kind: input, shape index: {}]
  %s4 = inlined_call_operand.vmem [shape: f32[1,128], index: 4, kind: input, shape index: {}]
  %s5 = inlined_call_operand.hbm [shape: f32[128,128], index: 5, kind: output, shape index: {}]
  %s6 = sld [smem:[#allocation0]]
  $region53: #{bottleneck_forward.5} parent=0
    _
  %s8 = ssub.s32 1, %s6
  %s9 = scalar_select 0, %s8, %s6
  $region1: #{bottleneck_forward.5} parent=0
    #allocation2 [shape = 'u8[65536]{0}', space=vmem, size = 0x10000, scoped, tag = 'output window, operand 0']
    #allocation3 [shape = 's32[2]{0}', space=sflag, size = 0x8, scoped, tag = 'scoped memory for bottleneck_forward.5']
    %10 = vsyncpa [#allocation3], 0
    %s11 = scalar_lea.sflag [#allocation3], 1
    %12 = vsyncpa %s11, 0
    loop: start=0, step=1, limit=4
    $region2: #{bottleneck_forward.5} parent=1 // loop_pre_header
      _
    $region3: #{bottleneck_forward.5} parent=1 // loop_header
      %s14 = sphi 0, %s18
      %p15 = scmp.ge.s32.totalorder %s14, 4
      %s21 = sphi 0, %s33
      %s22 = sphi 0, %s29
      %s23 = sphi 0, %s21
      %s24 = sphi 0, %s22
      %s25 = sphi 0, %s23
      %s26 = sphi 0, %s24
      %s36 = sphi 0, %s38
      %s39 = sphi 0, %s36
      %s40 = sphi 0, %s39
      %s56 = sphi 0, %s40
      %s62 = sphi 0, %s64
      %s65 = sphi 0, %s62
      %s66 = sphi 0, %s65
      %s82 = sphi 0, %s66
      %s88 = sphi 0, %s90
      %s91 = sphi 0, %s88
      %s92 = sphi 0, %s91
      %s108 = sphi 0, %s92
      %s114 = sphi 0, %s116
      %s117 = sphi 0, %s114
      %s118 = sphi 0, %s117
      %s134 = sphi 0, %s118
      %s140 = sphi 0, %s142
      %s143 = sphi 0, %s140
      %s144 = sphi 0, %s143
      %s160 = sphi 0, %s144
      %s168 = sphi 0, %s170
      %s171 = sphi 0, %s168
      %s172 = sphi 0, %s171
      %s188 = sphi 0, %s172
    $region4: #{bottleneck_forward.5} parent=1 // loop_header_branch
      %17 = sbr.rel (%p15) target = $region8
    $region5: #{bottleneck_forward.5} parent=1 // loop_body
      %s19 = ssub.s32 %s14, 1
      %s20 = ssub.s32 %s14, 2
      %s27 = sadd.s32 1, %s22
      %p28 = scmp.ge.s32.totalorder %s27, 1
      %s29 = scalar_select %p28, 0, %s27
      %s30 = sadd.s32 1, %s21
      %s31 = scalar_select %p28, %s30, %s21
      %p32 = scmp.ge.s32.totalorder %s31, 2
      %s33 = scalar_select %p32, 0, %s31
      %s34 = ssub.s32 %s21, %s33
      %p35 = scmp.eq.s32.totalorder %s34, 0
      %s37 = sadd.s32 %s36, 1
      %s38 = scalar_select %p35, %s36, %s37
      %p41 = pneg %p35
      %p42 = scmp.eq.s32.totalorder %s14, 1
      %p43 = por %p41, %p42
      %p44 = scmp.ne.s32.totalorder %s36, %s39
      %p45 = scmp.eq.s32.totalorder %s14, 0
      %p46 = por %p44, %p45
      %p47 = scmp.ne.s32.totalorder %s36, %s39
      %p48 = scmp.eq.s32.totalorder %s19, 1
      %p49 = por %p47, %p48
      %p50 = scmp.ne.s32.totalorder %s39, %s40
      %p51 = scmp.eq.s32.totalorder %s19, 0
      %p52 = por %p50, %p51
      %p53 = scmp.ne.s32.totalorder %s39, %s40
      %p54 = scmp.eq.s32.totalorder %s20, 1
      %p55 = por %p53, %p54
      %p57 = scmp.ne.s32.totalorder %s40, %s56
      %p58 = scmp.eq.s32.totalorder %s20, 0
      %p59 = por %p57, %p58
      %s60 = ssub.s32 %s21, %s33
      %p61 = scmp.eq.s32.totalorder %s60, 0
      %s63 = sadd.s32 %s62, 1
      %s64 = scalar_select %p61, %s62, %s63
      %p67 = pneg %p61
      %p68 = scmp.eq.s32.totalorder %s14, 1
      %p69 = por %p67, %p68
      %p70 = scmp.ne.s32.totalorder %s62, %s65
      %p71 = scmp.eq.s32.totalorder %s14, 0
      %p72 = por %p70, %p71
      %p73 = scmp.ne.s32.totalorder %s62, %s65
      %p74 = scmp.eq.s32.totalorder %s19, 1
      %p75 = por %p73, %p74
      %p76 = scmp.ne.s32.totalorder %s65, %s66
      %p77 = scmp.eq.s32.totalorder %s19, 0
      %p78 = por %p76, %p77
      %p79 = scmp.ne.s32.totalorder %s65, %s66
      %p80 = scmp.eq.s32.totalorder %s20, 1
      %p81 = por %p79, %p80
      %p83 = scmp.ne.s32.totalorder %s66, %s82
      %p84 = scmp.eq.s32.totalorder %s20, 0
      %p85 = por %p83, %p84
      %s86 = ssub.s32 %s22, %s29
      %p87 = scmp.eq.s32.totalorder %s86, 0
      %s89 = sadd.s32 %s88, 1
      %s90 = scalar_select %p87, %s88, %s89
      %p93 = pneg %p87
      %p94 = scmp.eq.s32.totalorder %s14, 1
      %p95 = por %p93, %p94
      %p96 = scmp.ne.s32.totalorder %s88, %s91
      %p97 = scmp.eq.s32.totalorder %s14, 0
      %p98 = por %p96, %p97
      %p99 = scmp.ne.s32.totalorder %s88, %s91
      %p100 = scmp.eq.s32.totalorder %s19, 1
      %p101 = por %p99, %p100
      %p102 = scmp.ne.s32.totalorder %s91, %s92
      %p103 = scmp.eq.s32.totalorder %s19, 0
      %p104 = por %p102, %p103
      %p105 = scmp.ne.s32.totalorder %s91, %s92
      %p106 = scmp.eq.s32.totalorder %s20, 1
      %p107 = por %p105, %p106
      %p109 = scmp.ne.s32.totalorder %s92, %s108
      %p110 = scmp.eq.s32.totalorder %s20, 0
      %p111 = por %p109, %p110
      %s112 = ssub.s32 %s22, %s29
      %p113 = scmp.eq.s32.totalorder %s112, 0
      %s115 = sadd.s32 %s114, 1
      %s116 = scalar_select %p113, %s114, %s115
      %p119 = pneg %p113
      %p120 = scmp.eq.s32.totalorder %s14, 1
      %p121 = por %p119, %p120
      %p122 = scmp.ne.s32.totalorder %s114, %s117
      %p123 = scmp.eq.s32.totalorder %s14, 0
      %p124 = por %p122, %p123
      %p125 = scmp.ne.s32.totalorder %s114, %s117
      %p126 = scmp.eq.s32.totalorder %s19, 1
      %p127 = por %p125, %p126
      %p128 = scmp.ne.s32.totalorder %s117, %s118
      %p129 = scmp.eq.s32.totalorder %s19, 0
      %p130 = por %p128, %p129
      %p131 = scmp.ne.s32.totalorder %s117, %s118
      %p132 = scmp.eq.s32.totalorder %s20, 1
      %p133 = por %p131, %p132
      %p135 = scmp.ne.s32.totalorder %s118, %s134
      %p136 = scmp.eq.s32.totalorder %s20, 0
      %p137 = por %p135, %p136
      %s138 = ssub.s32 %s22, %s29
      %p139 = scmp.eq.s32.totalorder %s138, 0
      %s141 = sadd.s32 %s140, 1
      %s142 = scalar_select %p139, %s140, %s141
      %p145 = pneg %p139
      %p146 = scmp.eq.s32.totalorder %s14, 1
      %p147 = por %p145, %p146
      %p148 = scmp.ne.s32.totalorder %s140, %s143
      %p149 = scmp.eq.s32.totalorder %s14, 0
      %p150 = por %p148, %p149
      %p151 = scmp.ne.s32.totalorder %s140, %s143
      %p152 = scmp.eq.s32.totalorder %s19, 1
      %p153 = por %p151, %p152
      %p154 = scmp.ne.s32.totalorder %s143, %s144
      %p155 = scmp.eq.s32.totalorder %s19, 0
      %p156 = por %p154, %p155
      %p157 = scmp.ne.s32.totalorder %s143, %s144
      %p158 = scmp.eq.s32.totalorder %s20, 1
      %p159 = por %p157, %p158
      %p161 = scmp.ne.s32.totalorder %s144, %s160
      %p162 = scmp.eq.s32.totalorder %s20, 0
      %p163 = por %p161, %p162
      %s164 = ssub.s32 %s21, %s33
      %s165 = ssub.s32 %s22, %s29
      %s166 = sor.u32 %s164, %s165
      %p167 = scmp.eq.s32.totalorder %s166, 0
      %s169 = sadd.s32 %s168, 1
      %s170 = scalar_select %p167, %s168, %s169
      %p173 = pneg %p167
      %p174 = scmp.eq.s32.totalorder %s14, 1
      %p175 = por %p173, %p174
      %p176 = scmp.ne.s32.totalorder %s168, %s171
      %p177 = scmp.eq.s32.totalorder %s14, 0
      %p178 = por %p176, %p177
      %p179 = scmp.ne.s32.totalorder %s168, %s171
      %p180 = scmp.eq.s32.totalorder %s19, 1
      %p181 = por %p179, %p180
      %p182 = scmp.ne.s32.totalorder %s171, %s172
      %p183 = scmp.eq.s32.totalorder %s19, 0
      %p184 = por %p182, %p183
      %p185 = scmp.ne.s32.totalorder %s171, %s172
      %p186 = scmp.eq.s32.totalorder %s20, 1
      %p187 = por %p185, %p186
      %p189 = scmp.ne.s32.totalorder %s172, %s188
      %p190 = scmp.eq.s32.totalorder %s20, 0
      %p191 = por %p189, %p190
      %p192 = scmp.le.s32.totalorder 1, %s14
      %p193 = scmp.lt.s32.totalorder %s14, 3
      %p194 = pnand %p192, %p193
      %p195 = pneg %p194
      // Predicated region
      $region9: #{bottleneck_forward.5} parent=5 // pred_check
        _
      $region10: #{bottleneck_forward.5} parent=5 // pred_check_branch
        %197 = sbr.rel (%p194) target = $region12
      $region11: #{bottleneck_forward.5} parent=5 // pred_region
        %s198 = ssub.s32 %s14, 1
        // Predicated region
        $region13: #{bottleneck_forward.5} parent=11 // pred_check
          %p199 = pneg %p104
        $region14: #{bottleneck_forward.5} parent=11 // pred_check_branch
          %201 = sbr.rel (%p199) target = $region16
        $region15: #{bottleneck_forward.5} parent=11 // pred_region
          %p202 = scmp.lt.s32.totalorder %s24, 0
          %s203 = scalar_select %p202, %s24, 0
          %s204 = smul.addr %s203, 4
          %s205 = scalar_lea.vmem %s2, %s204
        $region16: #{bottleneck_forward.5} parent=11 // pred_fallthru
          _
        // Predicated region
        $region17: #{bottleneck_forward.5} parent=11 // pred_check
          %p206 = pneg %p130
        $region18: #{bottleneck_forward.5} parent=11 // pred_check_branch
          %208 = sbr.rel (%p206) target = $region20
        $region19: #{bottleneck_forward.5} parent=11 // pred_region
          %p209 = scmp.lt.s32.totalorder %s24, 0
          %s210 = scalar_select %p209, %s24, 0
          %s211 = smul.addr %s210, 4
          %s212 = scalar_lea.vmem %s3, %s211
        $region20: #{bottleneck_forward.5} parent=11 // pred_fallthru
          _
        // Predicated region
        $region21: #{bottleneck_forward.5} parent=11 // pred_check
          %p213 = pneg %p156
        $region22: #{bottleneck_forward.5} parent=11 // pred_check_branch
          %215 = sbr.rel (%p213) target = $region24
        $region23: #{bottleneck_forward.5} parent=11 // pred_region
          %p216 = scmp.lt.s32.totalorder %s24, 0
          %s217 = scalar_select %p216, %s24, 0
          %s218 = scalar_lea.vmem %s4, %s217
        $region24: #{bottleneck_forward.5} parent=11 // pred_fallthru
          _
      $region12: #{bottleneck_forward.5} parent=5 // pred_fallthru
        _
      %p219 = scmp.lt.s32.totalorder %s14, 2
      // Predicated region
      $region25: #{bottleneck_forward.5} parent=5 // pred_check
        %p220 = pneg %p219
      $region26: #{bottleneck_forward.5} parent=5 // pred_check_branch
        %222 = sbr.rel (%p220) target = $region28
      $region27: #{bottleneck_forward.5} parent=5 // pred_region
        // Predicated region
        $region29: #{bottleneck_forward.5} parent=27 // pred_check
          %p223 = pneg %p46
        $region30: #{bottleneck_forward.5} parent=27 // pred_check_branch
          %225 = sbr.rel (%p223) target = $region32
        $region31: #{bottleneck_forward.5} parent=27 // pred_region
          %s226 = smul.u32 8, %s21
          %p227 = scmp.lt.s32.totalorder %s226, 15
          %s228 = scalar_select %p227, %s226, 15
          %s229 = smul.addr %s228, 4
          %s230 = scalar_lea.vmem %s0, %s229
          %s231 = smul.u32 8, %s21
        $region32: #{bottleneck_forward.5} parent=27 // pred_fallthru
          _
        // Predicated region
        $region33: #{bottleneck_forward.5} parent=27 // pred_check
          %p232 = pneg %p72
        $region34: #{bottleneck_forward.5} parent=27 // pred_check_branch
          %234 = sbr.rel (%p232) target = $region36
        $region35: #{bottleneck_forward.5} parent=27 // pred_region
          %s235 = smul.u32 8, %s21
          %p236 = scmp.lt.s32.totalorder %s235, 15
          %s237 = scalar_select %p236, %s235, 15
          %s238 = smul.addr %s237, 4
          %s239 = scalar_lea.vmem %s1, %s238
          %s240 = smul.u32 8, %s21
        $region36: #{bottleneck_forward.5} parent=27 // pred_fallthru
          _
      $region28: #{bottleneck_forward.5} parent=5 // pred_fallthru
        _
      %p241 = scmp.le.s32.totalorder 1, %s14
      %p242 = scmp.lt.s32.totalorder %s14, 3
      %p243 = pnand %p241, %p242
      %p244 = pneg %p243
      // Predicated region
      $region37: #{bottleneck_forward.5} parent=5 // pred_check
        _
      $region38: #{bottleneck_forward.5} parent=5 // pred_check_branch
        %246 = sbr.rel (%p243) target = $region40
      $region39: #{bottleneck_forward.5} parent=5 // pred_region
        %s247 = ssub.s32 %s14, 1
        %s248 = smul.u32 8, %s23
        %p249 = scmp.lt.s32.totalorder %s248, 15
        %s250 = scalar_select %p249, %s248, 15
        %s251 = smul.addr %s250, 4
        %s252 = scalar_lea.vmem %s0, %s251
        %p253 = pneg %p52
        %p254 = pneg %p49
        %s255 = smul.u32 8, %s23
        %p256 = scmp.lt.s32.totalorder %s255, 15
        %s257 = scalar_select %p256, %s255, 15
        %s258 = smul.addr %s257, 4
        %s259 = scalar_lea.vmem %s1, %s258
        %p260 = pneg %p78
        %p261 = pneg %p75
        %p262 = scmp.lt.s32.totalorder %s24, 0
        %s263 = scalar_select %p262, %s24, 0
        %s264 = smul.addr %s263, 4
        %s265 = scalar_lea.vmem %s2, %s264
        %p266 = pneg %p104
        %p267 = pneg %p101
        %p268 = scmp.lt.s32.totalorder %s24, 0
        %s269 = scalar_select %p268, %s24, 0
        %s270 = smul.addr %s269, 4
        %s271 = scalar_lea.vmem %s3, %s270
        %p272 = pneg %p130
        %p273 = pneg %p127
        %p274 = scmp.lt.s32.totalorder %s24, 0
        %s275 = scalar_select %p274, %s24, 0
        %s276 = scalar_lea.vmem %s4, %s275
        %p277 = pneg %p156
        %p278 = pneg %p153
        %p279 = pneg %p184
        %p280 = pneg %p181
        %s281 = sand.u32 %s171, 1
        %s282 = scalar_lea.sflag [#allocation3], %s281
        %s283 = sand.u32 %s171, 1
        %s284 = smul.addr %s283, 64
        %s285 = scalar_lea.vmem [#allocation2], %s284
        %s286 = smul.u32 8, %s23
        %p287 = scmp.lt.s32.totalorder %s286, 15
        %s288 = scalar_select %p287, %s286, 15
        %s289 = smul.addr %s288, 4
        %s290 = scalar_lea.vmem %s0, %s289
        %s291 = smul.u32 8, %s23
        %s292 = smul.u32 8, %s23
        %p293 = scmp.lt.s32.totalorder %s292, 15
        %s294 = scalar_select %p293, %s292, 15
        %s295 = smul.addr %s294, 4
        %s296 = scalar_lea.vmem %s1, %s295
        %s297 = smul.u32 8, %s23
        %p298 = scmp.lt.s32.totalorder %s24, 0
        %s299 = scalar_select %p298, %s24, 0
        %s300 = smul.addr %s299, 4
        %s301 = scalar_lea.vmem %s2, %s300
        %p302 = scmp.lt.s32.totalorder %s24, 0
        %s303 = scalar_select %p302, %s24, 0
        %s304 = smul.addr %s303, 4
        %s305 = scalar_lea.vmem %s3, %s304
        %p306 = scmp.lt.s32.totalorder %s24, 0
        %s307 = scalar_select %p306, %s24, 0
        %s308 = scalar_lea.vmem %s4, %s307
        %s309 = smul.u32 8, %s23
        %v311 = vld [vmem:[%s290] sm:$0xf]
        %v312 = vld [vmem:[%s290 + $0x4] sm:$0xf]
        %v313 = vld [vmem:[%s290 + $0x8] sm:$0xf]
        %v314 = vld [vmem:[%s290 + $0xc] sm:$0xf]
        %v315 = vld [vmem:[%s290 + $0x10] sm:$0xf]
        %v316 = vld [vmem:[%s290 + $0x14] sm:$0xf]
        %v317 = vld [vmem:[%s290 + $0x18] sm:$0xf]
        %v318 = vld [vmem:[%s290 + $0x1c] sm:$0xf]
        %v319 = vld [vmem:[%s301] sm:$0xf]
        %v320 = vld [vmem:[%s301 + $0x4] sm:$0xf]
        %v321 = vld [vmem:[%s301 + $0x8] sm:$0xf]
        %v322 = vld [vmem:[%s301 + $0xc] sm:$0xf]
        %v323 = vld [vmem:[%s301 + $0x10] sm:$0xf]
        %v324 = vld [vmem:[%s301 + $0x14] sm:$0xf]
        %v325 = vld [vmem:[%s301 + $0x18] sm:$0xf]
        %v326 = vld [vmem:[%s301 + $0x1c] sm:$0xf]
        %v327 = vld [vmem:[%s301 + $0x20] sm:$0xf]
        %v328 = vld [vmem:[%s301 + $0x24] sm:$0xf]
        %v329 = vld [vmem:[%s301 + $0x28] sm:$0xf]
        %v330 = vld [vmem:[%s301 + $0x2c] sm:$0xf]
        %v331 = vld [vmem:[%s301 + $0x30] sm:$0xf]
        %v332 = vld [vmem:[%s301 + $0x34] sm:$0xf]
        %v333 = vld [vmem:[%s301 + $0x38] sm:$0xf]
        %v334 = vld [vmem:[%s301 + $0x3c] sm:$0xf]
        %v335 = vld [vmem:[%s296] sm:$0xf]
        %v336 = vld [vmem:[%s296 + $0x4] sm:$0xf]
        %v337 = vld [vmem:[%s296 + $0x8] sm:$0xf]
        %v338 = vld [vmem:[%s296 + $0xc] sm:$0xf]
        %v339 = vld [vmem:[%s296 + $0x10] sm:$0xf]
        %v340 = vld [vmem:[%s296 + $0x14] sm:$0xf]
        %v341 = vld [vmem:[%s296 + $0x18] sm:$0xf]
        %v342 = vld [vmem:[%s296 + $0x1c] sm:$0xf]
        %v343 = vld [vmem:[%s305] sm:$0xf]
        %v344 = vld [vmem:[%s305 + $0x4] sm:$0xf]
        %v345 = vld [vmem:[%s305 + $0x8] sm:$0xf]
        %v346 = vld [vmem:[%s305 + $0xc] sm:$0xf]
        %v347 = vld [vmem:[%s305 + $0x10] sm:$0xf]
        %v348 = vld [vmem:[%s305 + $0x14] sm:$0xf]
        %v349 = vld [vmem:[%s305 + $0x18] sm:$0xf]
        %v350 = vld [vmem:[%s305 + $0x1c] sm:$0xf]
        %v351 = vld [vmem:[%s305 + $0x20] sm:$0xf]
        %v352 = vld [vmem:[%s305 + $0x24] sm:$0xf]
        %v353 = vld [vmem:[%s305 + $0x28] sm:$0xf]
        %v354 = vld [vmem:[%s305 + $0x2c] sm:$0xf]
        %v355 = vld [vmem:[%s305 + $0x30] sm:$0xf]
        %v356 = vld [vmem:[%s305 + $0x34] sm:$0xf]
        %v357 = vld [vmem:[%s305 + $0x38] sm:$0xf]
        %v358 = vld [vmem:[%s305 + $0x3c] sm:$0xf]
        %v367 = vunpack.c.l.b16 %v335
        %v368 = vunpack.c.l.b16 %v336
        %v369 = vunpack.c.l.b16 %v337
        %v370 = vunpack.c.l.b16 %v338
        %v371 = vunpack.c.l.b16 %v339
        %v372 = vunpack.c.l.b16 %v340
        %v373 = vunpack.c.l.b16 %v341
        %v374 = vunpack.c.l.b16 %v342
        %v375 = vpack.c.b16 %v368, %v367
        %v376 = vpack.c.b16 %v370, %v369
        %v377 = vpack.c.b16 %v372, %v371
        %v378 = vpack.c.b16 %v374, %v373
        %v399 = vunpack.c.l.b16 %v343
        %v400 = vunpack.c.l.b16 %v344
        %v401 = vunpack.c.l.b16 %v345
        %v402 = vunpack.c.l.b16 %v346
        %v403 = vunpack.c.l.b16 %v347
        %v404 = vunpack.c.l.b16 %v348
        %v405 = vunpack.c.l.b16 %v349
        %v406 = vunpack.c.l.b16 %v350
        %v407 = vunpack.c.l.b16 %v351
        %v408 = vunpack.c.l.b16 %v352
        %v409 = vunpack.c.l.b16 %v353
        %v410 = vunpack.c.l.b16 %v354
        %v411 = vunpack.c.l.b16 %v355
        %v412 = vunpack.c.l.b16 %v356
        %v413 = vunpack.c.l.b16 %v357
        %v414 = vunpack.c.l.b16 %v358
        %v415 = vpack.c.b16 %v400, %v399
        %v416 = vpack.c.b16 %v402, %v401
        %v417 = vpack.c.b16 %v404, %v403
        %v418 = vpack.c.b16 %v406, %v405
        %v419 = vpack.c.b16 %v408, %v407
        %v420 = vpack.c.b16 %v410, %v409
        %v421 = vpack.c.b16 %v412, %v411
        %v422 = vpack.c.b16 %v414, %v413
        %431 = vmatprep.subr.bf16.mxu0 0
        %432 = vmatpush1.bf16.msra.mxu0 %v415
        %433 = vmatprep.subr.bf16.mxu0 0
        %434 = vmatpush1.bf16.msra.mxu0 %v416
        %435 = vmatprep.subr.bf16.mxu0 0
        %436 = vmatpush1.bf16.msra.mxu0 %v417
        %437 = vmatprep.subr.bf16.mxu0 0
        %438 = vmatpush1.bf16.msra.mxu0 %v418
        %439 = vmatprep.subr.bf16.mxu0 0
        %440 = vmatpush1.bf16.msra.mxu0 %v419
        %441 = vmatprep.subr.bf16.mxu0 0
        %442 = vmatpush1.bf16.msra.mxu0 %v420
        %443 = vmatprep.subr.bf16.mxu0 0
        %444 = vmatpush1.bf16.msra.mxu0 %v421
        %445 = vmatprep.subr.bf16.mxu0 0
        %446 = vmatpush1.bf16.msra.mxu0 %v422
        %447 = vmatprep.subr.bf16.mxu0 0
        %448 = vmatpush1.bf16.msra.mxu0 0
        %449 = vmatprep.subr.bf16.mxu0 0
        %450 = vmatpush1.bf16.msra.mxu0 0
        %451 = vmatprep.subr.bf16.mxu0 0
        %452 = vmatpush1.bf16.msra.mxu0 0
        %453 = vmatprep.subr.bf16.mxu0 0
        %454 = vmatpush1.bf16.msra.mxu0 0
        %455 = vmatprep.subr.bf16.mxu0 0
        %456 = vmatpush1.bf16.msra.mxu0 0
        %457 = vmatprep.subr.bf16.mxu0 0
        %458 = vmatpush1.bf16.msra.mxu0 0
        %459 = vmatprep.subr.bf16.mxu0 0
        %460 = vmatpush1.bf16.msra.mxu0 0
        %461 = vmatprep.subr.bf16.mxu0 0
        %462 = vmatpush1.bf16.msra.mxu0 0
        %463 = vmatprep.mubr.bf16.mxu0 0
        %464 = vmatmul.mubr.bf16.gmra.mrb[0].mxu0 %v375
        %v465 = vpop.f32.mrb[0].mxu0
        %v466 = vadd.f32 0.0, %v465
        %v467 = vpop.f32.mrb[0].mxu0
        %v468 = vpop.f32.mrb[0].mxu0
        %v469 = vadd.f32 0.0, %v468
        %v470 = vpop.f32.mrb[0].mxu0
        %471 = vmatprep.mubr.bf16.mxu0 0
        %472 = vmatmul.mubr.bf16.gmra.mrb[0].mxu0 %v376
        %v473 = vpop.f32.mrb[0].mxu0
        %v474 = vadd.f32 0.0, %v473
        %v475 = vpop.f32.mrb[0].mxu0
        %v476 = vpop.f32.mrb[0].mxu0
        %v477 = vadd.f32 0.0, %v476
        %v478 = vpop.f32.mrb[0].mxu0
        %479 = vmatprep.mubr.bf16.mxu0 0
        %480 = vmatmul.mubr.bf16.gmra.mrb[0].mxu0 %v377
        %v481 = vpop.f32.mrb[0].mxu0
        %v482 = vadd.f32 0.0, %v481
        %v483 = vpop.f32.mrb[0].mxu0
        %v484 = vpop.f32.mrb[0].mxu0
        %v485 = vadd.f32 0.0, %v484
        %v486 = vpop.f32.mrb[0].mxu0
        %487 = vmatprep.mubr.bf16.mxu0 0
        %488 = vmatmul.mubr.bf16.gmra.mrb[0].mxu0 %v378
        %v489 = vpop.f32.mrb[0].mxu0
        %v490 = vadd.f32 0.0, %v489
        %v491 = vpop.f32.mrb[0].mxu0
        %v492 = vpop.f32.mrb[0].mxu0
        %v493 = vadd.f32 0.0, %v492
        %v494 = vpop.f32.mrb[0].mxu0
        %495 = vdwg.mxu0
        %v504 = vunpack.c.l.b16 %v311
        %v505 = vunpack.c.l.b16 %v312
        %v506 = vunpack.c.l.b16 %v313
        %v507 = vunpack.c.l.b16 %v314
        %v508 = vunpack.c.l.b16 %v315
        %v509 = vunpack.c.l.b16 %v316
        %v510 = vunpack.c.l.b16 %v317
        %v511 = vunpack.c.l.b16 %v318
        %v512 = vpack.c.b16 %v505, %v504
        %v513 = vpack.c.b16 %v507, %v506
        %v514 = vpack.c.b16 %v509, %v508
        %v515 = vpack.c.b16 %v511, %v510
        %v536 = vunpack.c.l.b16 %v319
        %v537 = vunpack.c.l.b16 %v320
        %v538 = vunpack.c.l.b16 %v321
        %v539 = vunpack.c.l.b16 %v322
        %v540 = vunpack.c.l.b16 %v323
        %v541 = vunpack.c.l.b16 %v324
        %v542 = vunpack.c.l.b16 %v325
        %v543 = vunpack.c.l.b16 %v326
        %v544 = vunpack.c.l.b16 %v327
        %v545 = vunpack.c.l.b16 %v328
        %v546 = vunpack.c.l.b16 %v329
        %v547 = vunpack.c.l.b16 %v330
        %v548 = vunpack.c.l.b16 %v331
        %v549 = vunpack.c.l.b16 %v332
        %v550 = vunpack.c.l.b16 %v333
        %v551 = vunpack.c.l.b16 %v334
        %v552 = vpack.c.b16 %v537, %v536
        %v553 = vpack.c.b16 %v539, %v538
        %v554 = vpack.c.b16 %v541, %v540
        %v555 = vpack.c.b16 %v543, %v542
        %v556 = vpack.c.b16 %v545, %v544
        %v557 = vpack.c.b16 %v547, %v546
        %v558 = vpack.c.b16 %v549, %v548
        %v559 = vpack.c.b16 %v551, %v550
        %568 = vmatprep.subr.bf16.mxu0 0
        %569 = vmatpush1.bf16.msra.mxu0 %v552
        %570 = vmatprep.subr.bf16.mxu0 0
        %571 = vmatpush1.bf16.msra.mxu0 %v553
        %572 = vmatprep.subr.bf16.mxu0 0
        %573 = vmatpush1.bf16.msra.mxu0 %v554
        %574 = vmatprep.subr.bf16.mxu0 0
        %575 = vmatpush1.bf16.msra.mxu0 %v555
        %576 = vmatprep.subr.bf16.mxu0 0
        %577 = vmatpush1.bf16.msra.mxu0 %v556
        %578 = vmatprep.subr.bf16.mxu0 0
        %579 = vmatpush1.bf16.msra.mxu0 %v557
        %580 = vmatprep.subr.bf16.mxu0 0
        %581 = vmatpush1.bf16.msra.mxu0 %v558
        %582 = vmatprep.subr.bf16.mxu0 0
        %583 = vmatpush1.bf16.msra.mxu0 %v559
        %584 = vmatprep.subr.bf16.mxu0 0
        %585 = vmatpush1.bf16.msra.mxu0 0
        %586 = vmatprep.subr.bf16.mxu0 0
        %587 = vmatpush1.bf16.msra.mxu0 0
        %588 = vmatprep.subr.bf16.mxu0 0
        %589 = vmatpush1.bf16.msra.mxu0 0
        %590 = vmatprep.subr.bf16.mxu0 0
        %591 = vmatpush1.bf16.msra.mxu0 0
        %592 = vmatprep.subr.bf16.mxu0 0
        %593 = vmatpush1.bf16.msra.mxu0 0
        %594 = vmatprep.subr.bf16.mxu0 0
        %595 = vmatpush1.bf16.msra.mxu0 0
        %596 = vmatprep.subr.bf16.mxu0 0
        %597 = vmatpush1.bf16.msra.mxu0 0
        %598 = vmatprep.subr.bf16.mxu0 0
        %599 = vmatpush1.bf16.msra.mxu0 0
        %600 = vmatprep.mubr.bf16.mxu0 0
        %601 = vmatmul.mubr.bf16.gmra.mrb[0].mxu0 %v512
        %v602 = vpop.f32.mrb[0].mxu0
        %v603 = vadd.f32 %v466, %v602
        %v604 = vpop.f32.mrb[0].mxu0
        %v605 = vpop.f32.mrb[0].mxu0
        %v606 = vadd.f32 %v469, %v605
        %v607 = vpop.f32.mrb[0].mxu0
        %608 = vmatprep.mubr.bf16.mxu0 0
        %609 = vmatmul.mubr.bf16.gmra.mrb[0].mxu0 %v513
        %v610 = vpop.f32.mrb[0].mxu0
        %v611 = vadd.f32 %v474, %v610
        %v612 = vpop.f32.mrb[0].mxu0
        %v613 = vpop.f32.mrb[0].mxu0
        %v614 = vadd.f32 %v477, %v613
        %v615 = vpop.f32.mrb[0].mxu0
        %616 = vmatprep.mubr.bf16.mxu0 0
        %617 = vmatmul.mubr.bf16.gmra.mrb[0].mxu0 %v514
        %v618 = vpop.f32.mrb[0].mxu0
        %v619 = vadd.f32 %v482, %v618
        %v620 = vpop.f32.mrb[0].mxu0
        %v621 = vpop.f32.mrb[0].mxu0
        %v622 = vadd.f32 %v485, %v621
        %v623 = vpop.f32.mrb[0].mxu0
        %624 = vmatprep.mubr.bf16.mxu0 0
        %625 = vmatmul.mubr.bf16.gmra.mrb[0].mxu0 %v515
        %v626 = vpop.f32.mrb[0].mxu0
        %v627 = vadd.f32 %v490, %v626
        %v628 = vpop.f32.mrb[0].mxu0
        %v629 = vpop.f32.mrb[0].mxu0
        %v630 = vadd.f32 %v493, %v629
        %v631 = vpop.f32.mrb[0].mxu0
        %632 = vdwg.mxu0
        %v633 = vld [vmem:[%s308] sm:$0x1]
        %v635 = vlaneseq
        %v636 = vshrl.u32 %v635, 7
        %v637 = vsub.s32 0, %v636
        %v638 = vrot.slane %v633, %v637
        %v640 = vadd.f32 %v603, %v638
        %v641 = vadd.f32 %v606, %v638
        %v642 = vadd.f32 %v611, %v638
        %v643 = vadd.f32 %v614, %v638
        %v644 = vadd.f32 %v619, %v638
        %v645 = vadd.f32 %v622, %v638
        %v646 = vadd.f32 %v627, %v638
        %v647 = vadd.f32 %v630, %v638
        %v648 = vmax.f32 %v640, 0.0
        %v649 = vmax.f32 %v641, 0.0
        %v650 = vmax.f32 %v642, 0.0
        %v651 = vmax.f32 %v643, 0.0
        %v652 = vmax.f32 %v644, 0.0
        %v653 = vmax.f32 %v645, 0.0
        %v654 = vmax.f32 %v646, 0.0
        %v655 = vmax.f32 %v647, 0.0
        %656 = vst [vmem:[%s285] sm:$0xff] %v648
        %657 = vst [vmem:[%s285 + $0x8] sm:$0xff] %v649
        %658 = vst [vmem:[%s285 + $0x10] sm:$0xff] %v650
        %659 = vst [vmem:[%s285 + $0x18] sm:$0xff] %v651
        %660 = vst [vmem:[%s285 + $0x20] sm:$0xff] %v652
        %661 = vst [vmem:[%s285 + $0x28] sm:$0xff] %v653
        %662 = vst [vmem:[%s285 + $0x30] sm:$0xff] %v654
        %663 = vst [vmem:[%s285 + $0x38] sm:$0xff] %v655
        %s664 = sand.u32 %s171, 1
        %s665 = scalar_lea.sflag [#allocation3], %s664
        %s666 = sand.u32 %s171, 1
        %s667 = smul.addr %s666, 64
        %s668 = scalar_lea.vmem [#allocation2], %s667
        // Predicated region
        $region41: #{bottleneck_forward.5} parent=39 // pred_check
          %p669 = pneg %p181
        $region42: #{bottleneck_forward.5} parent=39 // pred_check_branch
          %671 = sbr.rel (%p669) target = $region44
        $region43: #{bottleneck_forward.5} parent=39 // pred_region
          %s672 = smul.u32 8, %s23
          %s674 = ssub.s32 1024, 1024
          %675 = vsyncadd %s665, %s674
          %s676 = sadd.s32 %s24, %s672
          %s677 = smul.addr %s676, 128
          %s678 = scalar_lea.hbm %s5, %s677
          %s679 = sshll.u32 %s668, 4
          %s680 = int_to_ptr.vmem [resolvable:$true] %s679
          %685 = dma.vmem_to_hbm [thread:$0]  %s680, 1024, %s678, %s665, 128, 128, 8
        $region44: #{bottleneck_forward.5} parent=39 // pred_fallthru
          _
      $region40: #{bottleneck_forward.5} parent=5 // pred_fallthru
        _
      %p686 = scmp.le.s32.totalorder 2, %s14
      // Predicated region
      $region45: #{bottleneck_forward.5} parent=5 // pred_check
        %p687 = pneg %p686
      $region46: #{bottleneck_forward.5} parent=5 // pred_check_branch
        %689 = sbr.rel (%p687) target = $region48
      $region47: #{bottleneck_forward.5} parent=5 // pred_region
        %s690 = ssub.s32 %s14, 2
        // Predicated region
        $region49: #{bottleneck_forward.5} parent=47 // pred_check
          %p691 = pneg %p187
        $region50: #{bottleneck_forward.5} parent=47 // pred_check_branch
          %693 = sbr.rel (%p691) target = $region52
        $region51: #{bottleneck_forward.5} parent=47 // pred_region
          %s694 = sand.u32 %s172, 1
          %s695 = scalar_lea.sflag [#allocation3], %s694
          %s696 = sand.u32 %s172, 1
          %s697 = smul.addr %s696, 64
          %s698 = scalar_lea.vmem [#allocation2], %s697
          %699 = dma.done %s695, 1024
        $region52: #{bottleneck_forward.5} parent=47 // pred_fallthru
          _
      $region48: #{bottleneck_forward.5} parent=5 // pred_fallthru
        _
    $region6: #{bottleneck_forward.5} parent=1 // loop_footer
      %s18 = sadd.s32 1, %s14
    $region7: #{bottleneck_forward.5} parent=1 // loop_footer_branch
      %13 = sbr.rel target = $region3
    $region8: #{bottleneck_forward.5} parent=1 // loop_exit
      _
    %700 = vsyncpa [#allocation3], 1
    %s701 = scalar_lea.sflag [#allocation3], 1
    %702 = vsyncpa %s701, 1

// kernel: bottleneck_forward.4
$region0: #{bottleneck_forward.4}
  #allocation0 [shape = 'u32[]', space=smem, size = 0x4, offset = 0x4, fixed_abs, tag = 'smem constant byte address 0x4 - core index']
  #allocation1 [shape = 'u32[144,128]{1,0:T(1,128)}', space=vmem, size = 0x12000, scoped, tag = 'internal scratch']
  %s0 = inlined_call_operand.vmem [shape: bf16[128,1152], index: 0, kind: input, shape index: {}]
  %s1 = inlined_call_operand.vmem [shape: bf16[1152,128], index: 1, kind: input, shape index: {}]
  %s2 = inlined_call_operand.vmem [shape: f32[1,128], index: 2, kind: input, shape index: {}]
  %s3 = inlined_call_operand.vmem [shape: bf16[128,128], index: 3, kind: output, shape index: {}]
  %s4 = sld [smem:[#allocation0]]
  $region45: #{bottleneck_forward.4} parent=0
    _
  %s6 = ssub.s32 1, %s4
  %s7 = scalar_select 0, %s6, %s4
  loop: start=0, step=1, limit=4
  $region2: #{bottleneck_forward.4} parent=0 // loop_pre_header
    _
  $region3: #{bottleneck_forward.4} parent=0 // loop_header
    %s9 = sphi 0, %s13
    %p10 = scmp.ge.s32.totalorder %s9, 4
    %s16 = sphi 0, %s28
    %s17 = sphi 0, %s24
    %s18 = sphi 0, %s16
    %s19 = sphi 0, %s17
    %s20 = sphi 0, %s18
    %s21 = sphi 0, %s19
    %s31 = sphi 0, %s33
    %s34 = sphi 0, %s31
    %s35 = sphi 0, %s34
    %s51 = sphi 0, %s35
    %s57 = sphi 0, %s59
    %s60 = sphi 0, %s57
    %s61 = sphi 0, %s60
    %s77 = sphi 0, %s61
    %s83 = sphi 0, %s85
    %s86 = sphi 0, %s83
    %s87 = sphi 0, %s86
    %s103 = sphi 0, %s87
    %s111 = sphi 0, %s113
    %s114 = sphi 0, %s111
    %s115 = sphi 0, %s114
    %s131 = sphi 0, %s115
  $region4: #{bottleneck_forward.4} parent=0 // loop_header_branch
    %12 = sbr.rel (%p10) target = $region8
  $region5: #{bottleneck_forward.4} parent=0 // loop_body
    %s14 = ssub.s32 %s9, 1
    %s15 = ssub.s32 %s9, 2
    %s22 = sadd.s32 1, %s17
    %p23 = scmp.ge.s32.totalorder %s22, 1
    %s24 = scalar_select %p23, 0, %s22
    %s25 = sadd.s32 1, %s16
    %s26 = scalar_select %p23, %s25, %s16
    %p27 = scmp.ge.s32.totalorder %s26, 2
    %s28 = scalar_select %p27, 0, %s26
    %s29 = ssub.s32 %s16, %s28
    %p30 = scmp.eq.s32.totalorder %s29, 0
    %s32 = sadd.s32 %s31, 1
    %s33 = scalar_select %p30, %s31, %s32
    %p36 = pneg %p30
    %p37 = scmp.eq.s32.totalorder %s9, 1
    %p38 = por %p36, %p37
    %p39 = scmp.ne.s32.totalorder %s31, %s34
    %p40 = scmp.eq.s32.totalorder %s9, 0
    %p41 = por %p39, %p40
    %p42 = scmp.ne.s32.totalorder %s31, %s34
    %p43 = scmp.eq.s32.totalorder %s14, 1
    %p44 = por %p42, %p43
    %p45 = scmp.ne.s32.totalorder %s34, %s35
    %p46 = scmp.eq.s32.totalorder %s14, 0
    %p47 = por %p45, %p46
    %p48 = scmp.ne.s32.totalorder %s34, %s35
    %p49 = scmp.eq.s32.totalorder %s15, 1
    %p50 = por %p48, %p49
    %p52 = scmp.ne.s32.totalorder %s35, %s51
    %p53 = scmp.eq.s32.totalorder %s15, 0
    %p54 = por %p52, %p53
    %s55 = ssub.s32 %s17, %s24
    %p56 = scmp.eq.s32.totalorder %s55, 0
    %s58 = sadd.s32 %s57, 1
    %s59 = scalar_select %p56, %s57, %s58
    %p62 = pneg %p56
    %p63 = scmp.eq.s32.totalorder %s9, 1
    %p64 = por %p62, %p63
    %p65 = scmp.ne.s32.totalorder %s57, %s60
    %p66 = scmp.eq.s32.totalorder %s9, 0
    %p67 = por %p65, %p66
    %p68 = scmp.ne.s32.totalorder %s57, %s60
    %p69 = scmp.eq.s32.totalorder %s14, 1
    %p70 = por %p68, %p69
    %p71 = scmp.ne.s32.totalorder %s60, %s61
    %p72 = scmp.eq.s32.totalorder %s14, 0
    %p73 = por %p71, %p72
    %p74 = scmp.ne.s32.totalorder %s60, %s61
    %p75 = scmp.eq.s32.totalorder %s15, 1
    %p76 = por %p74, %p75
    %p78 = scmp.ne.s32.totalorder %s61, %s77
    %p79 = scmp.eq.s32.totalorder %s15, 0
    %p80 = por %p78, %p79
    %s81 = ssub.s32 %s17, %s24
    %p82 = scmp.eq.s32.totalorder %s81, 0
    %s84 = sadd.s32 %s83, 1
    %s85 = scalar_select %p82, %s83, %s84
    %p88 = pneg %p82
    %p89 = scmp.eq.s32.totalorder %s9, 1
    %p90 = por %p88, %p89
    %p91 = scmp.ne.s32.totalorder %s83, %s86
    %p92 = scmp.eq.s32.totalorder %s9, 0
    %p93 = por %p91, %p92
    %p94 = scmp.ne.s32.totalorder %s83, %s86
    %p95 = scmp.eq.s32.totalorder %s14, 1
    %p96 = por %p94, %p95
    %p97 = scmp.ne.s32.totalorder %s86, %s87
    %p98 = scmp.eq.s32.totalorder %s14, 0
    %p99 = por %p97, %p98
    %p100 = scmp.ne.s32.totalorder %s86, %s87
    %p101 = scmp.eq.s32.totalorder %s15, 1
    %p102 = por %p100, %p101
    %p104 = scmp.ne.s32.totalorder %s87, %s103
    %p105 = scmp.eq.s32.totalorder %s15, 0
    %p106 = por %p104, %p105
    %s107 = ssub.s32 %s16, %s28
    %s108 = ssub.s32 %s17, %s24
    %s109 = sor.u32 %s107, %s108
    %p110 = scmp.eq.s32.totalorder %s109, 0
    %s112 = sadd.s32 %s111, 1
    %s113 = scalar_select %p110, %s111, %s112
    %p116 = pneg %p110
    %p117 = scmp.eq.s32.totalorder %s9, 1
    %p118 = por %p116, %p117
    %p119 = scmp.ne.s32.totalorder %s111, %s114
    %p120 = scmp.eq.s32.totalorder %s9, 0
    %p121 = por %p119, %p120
    %p122 = scmp.ne.s32.totalorder %s111, %s114
    %p123 = scmp.eq.s32.totalorder %s14, 1
    %p124 = por %p122, %p123
    %p125 = scmp.ne.s32.totalorder %s114, %s115
    %p126 = scmp.eq.s32.totalorder %s14, 0
    %p127 = por %p125, %p126
    %p128 = scmp.ne.s32.totalorder %s114, %s115
    %p129 = scmp.eq.s32.totalorder %s15, 1
    %p130 = por %p128, %p129
    %p132 = scmp.ne.s32.totalorder %s115, %s131
    %p133 = scmp.eq.s32.totalorder %s15, 0
    %p134 = por %p132, %p133
    %p135 = scmp.le.s32.totalorder 1, %s9
    %p136 = scmp.lt.s32.totalorder %s9, 3
    %p137 = pnand %p135, %p136
    %p138 = pneg %p137
    // Predicated region
    $region9: #{bottleneck_forward.4} parent=5 // pred_check
      _
    $region10: #{bottleneck_forward.4} parent=5 // pred_check_branch
      %140 = sbr.rel (%p137) target = $region12
    $region11: #{bottleneck_forward.4} parent=5 // pred_region
      %s141 = ssub.s32 %s9, 1
      // Predicated region
      $region13: #{bottleneck_forward.4} parent=11 // pred_check
        %p142 = pneg %p73
      $region14: #{bottleneck_forward.4} parent=11 // pred_check_branch
        %144 = sbr.rel (%p142) target = $region16
      $region15: #{bottleneck_forward.4} parent=11 // pred_region
        %p145 = scmp.lt.s32.totalorder %s19, 0
        %s146 = scalar_select %p145, %s19, 0
        %s147 = smul.addr %s146, 4
        %s148 = scalar_lea.vmem %s1, %s147
      $region16: #{bottleneck_forward.4} parent=11 // pred_fallthru
        _
      // Predicated region
      $region17: #{bottleneck_forward.4} parent=11 // pred_check
        %p149 = pneg %p99
      $region18: #{bottleneck_forward.4} parent=11 // pred_check_branch
        %151 = sbr.rel (%p149) target = $region20
      $region19: #{bottleneck_forward.4} parent=11 // pred_region
        %p152 = scmp.lt.s32.totalorder %s19, 0
        %s153 = scalar_select %p152, %s19, 0
        %s154 = scalar_lea.vmem %s2, %s153
      $region20: #{bottleneck_forward.4} parent=11 // pred_fallthru
        _
    $region12: #{bottleneck_forward.4} parent=5 // pred_fallthru
      _
    %p155 = scmp.lt.s32.totalorder %s9, 2
    // Predicated region
    $region21: #{bottleneck_forward.4} parent=5 // pred_check
      %p156 = pneg %p155
    $region22: #{bottleneck_forward.4} parent=5 // pred_check_branch
      %158 = sbr.rel (%p156) target = $region24
    $region23: #{bottleneck_forward.4} parent=5 // pred_region
      // Predicated region
      $region25: #{bottleneck_forward.4} parent=23 // pred_check
        %p159 = pneg %p41
      $region26: #{bottleneck_forward.4} parent=23 // pred_check_branch
        %161 = sbr.rel (%p159) target = $region28
      $region27: #{bottleneck_forward.4} parent=23 // pred_region
        %s162 = smul.u32 8, %s16
        %p163 = scmp.lt.s32.totalorder %s162, 15
        %s164 = scalar_select %p163, %s162, 15
        %s165 = smul.addr %s164, 9
        %s166 = smul.addr %s165, 4
        %s167 = scalar_lea.vmem %s0, %s166
        %s168 = smul.u32 8, %s16
      $region28: #{bottleneck_forward.4} parent=23 // pred_fallthru
        _
    $region24: #{bottleneck_forward.4} parent=5 // pred_fallthru
      _
    %p169 = scmp.le.s32.totalorder 1, %s9
    %p170 = scmp.lt.s32.totalorder %s9, 3
    %p171 = pnand %p169, %p170
    %p172 = pneg %p171
    // Predicated region
    $region29: #{bottleneck_forward.4} parent=5 // pred_check
      _
    $region30: #{bottleneck_forward.4} parent=5 // pred_check_branch
      %174 = sbr.rel (%p171) target = $region32
    $region31: #{bottleneck_forward.4} parent=5 // pred_region
      %s175 = ssub.s32 %s9, 1
      %s176 = smul.u32 8, %s18
      %p177 = scmp.lt.s32.totalorder %s176, 15
      %s178 = scalar_select %p177, %s176, 15
      %s179 = smul.addr %s178, 9
      %s180 = smul.addr %s179, 4
      %s181 = scalar_lea.vmem %s0, %s180
      %p182 = pneg %p47
      %p183 = pneg %p44
      %p184 = scmp.lt.s32.totalorder %s19, 0
      %s185 = scalar_select %p184, %s19, 0
      %s186 = smul.addr %s185, 4
      %s187 = scalar_lea.vmem %s1, %s186
      %p188 = pneg %p73
      %p189 = pneg %p70
      %p190 = scmp.lt.s32.totalorder %s19, 0
      %s191 = scalar_select %p190, %s19, 0
      %s192 = scalar_lea.vmem %s2, %s191
      %p193 = pneg %p99
      %p194 = pneg %p96
      %p195 = pneg %p127
      %p196 = pneg %p124
      %s197 = smul.u32 8, %s18
      %p198 = scmp.lt.s32.totalorder %s197, 15
      %s199 = scalar_select %p198, %s197, 15
      %p200 = scmp.lt.s32.totalorder %s19, 0
      %s201 = scalar_select %p200, %s19, 0
      %s202 = sadd.s32 %s201, %s199
      %s203 = smul.addr %s202, 4
      %s204 = scalar_lea.vmem %s3, %s203
      %s205 = smul.u32 8, %s18
      %p206 = scmp.lt.s32.totalorder %s205, 15
      %s207 = scalar_select %p206, %s205, 15
      %s208 = smul.addr %s207, 9
      %s209 = smul.addr %s208, 4
      %s210 = scalar_lea.vmem %s0, %s209
      %s211 = smul.u32 8, %s18
      %p212 = scmp.lt.s32.totalorder %s19, 0
      %s213 = scalar_select %p212, %s19, 0
      %s214 = smul.addr %s213, 4
      %s215 = scalar_lea.vmem %s1, %s214
      %p216 = scmp.lt.s32.totalorder %s19, 0
      %s217 = scalar_select %p216, %s19, 0
      %s218 = scalar_lea.vmem %s2, %s217
      %s219 = smul.u32 8, %s18
      %p220 = scmp.lt.s32.totalorder %s219, 15
      %s221 = scalar_select %p220, %s219, 15
      %p222 = scmp.lt.s32.totalorder %s19, 0
      %s223 = scalar_select %p222, %s19, 0
      %s224 = sadd.s32 %s223, %s221
      %s225 = smul.addr %s224, 4
      %s226 = scalar_lea.vmem %s3, %s225
      %s227 = smul.u32 8, %s18
      %v229 = vld [vmem:[%s210] sm:$0xff]
      %v230 = vld [vmem:[%s210 + $0x8] sm:$0xff]
      %v231 = vld [vmem:[%s210 + $0x10] sm:$0xff]
      %v232 = vld [vmem:[%s210 + $0x18] sm:$0xff]
      %v233 = vld [vmem:[%s210 + $0x20] sm:$0xf]
      %v234 = vld [vmem:[%s210 + $0x24] sm:$0xff]
      %v235 = vld [vmem:[%s210 + $0x2c] sm:$0xff]
      %v236 = vld [vmem:[%s210 + $0x34] sm:$0xff]
      %v237 = vld [vmem:[%s210 + $0x3c] sm:$0xff]
      %v238 = vld [vmem:[%s210 + $0x44] sm:$0xf]
      %v239 = vld [vmem:[%s210 + $0x48] sm:$0xff]
      %v240 = vld [vmem:[%s210 + $0x50] sm:$0xff]
      %v241 = vld [vmem:[%s210 + $0x58] sm:$0xff]
      %v242 = vld [vmem:[%s210 + $0x60] sm:$0xff]
      %v243 = vld [vmem:[%s210 + $0x68] sm:$0xf]
      %v244 = vld [vmem:[%s210 + $0x6c] sm:$0xff]
      %v245 = vld [vmem:[%s210 + $0x74] sm:$0xff]
      %v246 = vld [vmem:[%s210 + $0x7c] sm:$0xff]
      %v247 = vld [vmem:[%s210 + $0x84] sm:$0xff]
      %v248 = vld [vmem:[%s210 + $0x8c] sm:$0xf]
      %v249 = vld [vmem:[%s210 + $0x90] sm:$0xff]
      %v250 = vld [vmem:[%s210 + $0x98] sm:$0xff]
      %v251 = vld [vmem:[%s210 + $0xa0] sm:$0xff]
      %v252 = vld [vmem:[%s210 + $0xa8] sm:$0xff]
      %v253 = vld [vmem:[%s210 + $0xb0] sm:$0xf]
      %v254 = vld [vmem:[%s210 + $0xb4] sm:$0xff]
      %v255 = vld [vmem:[%s210 + $0xbc] sm:$0xff]
      %v256 = vld [vmem:[%s210 + $0xc4] sm:$0xff]
      %v257 = vld [vmem:[%s210 + $0xcc] sm:$0xff]
      %v258 = vld [vmem:[%s210 + $0xd4] sm:$0xf]
      %v259 = vld [vmem:[%s210 + $0xd8] sm:$0xff]
      %v260 = vld [vmem:[%s210 + $0xe0] sm:$0xff]
      %v261 = vld [vmem:[%s210 + $0xe8] sm:$0xff]
      %v262 = vld [vmem:[%s210 + $0xf0] sm:$0xff]
      %v263 = vld [vmem:[%s210 + $0xf8] sm:$0xf]
      %v264 = vld [vmem:[%s210 + $0xfc] sm:$0xff]
      %v265 = vld [vmem:[%s210 + $0x104] sm:$0xff]
      %v266 = vld [vmem:[%s210 + $0x10c] sm:$0xff]
      %v267 = vld [vmem:[%s210 + $0x114] sm:$0xff]
      %v268 = vld [vmem:[%s210 + $0x11c] sm:$0xf]
      %v269 = vld [vmem:[%s215] sm:$0xf]
      %v270 = vld [vmem:[%s215 + $0x4] sm:$0xf]
      %v271 = vld [vmem:[%s215 + $0x8] sm:$0xf]
      %v272 = vld [vmem:[%s215 + $0xc] sm:$0xf]
      %v273 = vld [vmem:[%s215 + $0x10] sm:$0xf]
      %v274 = vld [vmem:[%s215 + $0x14] sm:$0xf]
      %v275 = vld [vmem:[%s215 + $0x18] sm:$0xf]
      %v276 = vld [vmem:[%s215 + $0x1c] sm:$0xf]
      %v277 = vld [vmem:[%s215 + $0x20] sm:$0xf]
      %v278 = vld [vmem:[%s215 + $0x24] sm:$0xf]
      %v279 = vld [vmem:[%s215 + $0x28] sm:$0xf]
      %v280 = vld [vmem:[%s215 + $0x2c] sm:$0xf]
      %v281 = vld [vmem:[%s215 + $0x30] sm:$0xf]
      %v282 = vld [vmem:[%s215 + $0x34] sm:$0xf]
      %v283 = vld [vmem:[%s215 + $0x38] sm:$0xf]
      %v284 = vld [vmem:[%s215 + $0x3c] sm:$0xf]
      %v285 = vld [vmem:[%s215 + $0x40] sm:$0xf]
      %v286 = vld [vmem:[%s215 + $0x44] sm:$0xf]
      %v287 = vld [vmem:[%s215 + $0x48] sm:$0xf]
      %v288 = vld [vmem:[%s215 + $0x4c] sm:$0xf]
      %v289 = vld [vmem:[%s215 + $0x50] sm:$0xf]
      %v290 = vld [vmem:[%s215 + $0x54] sm:$0xf]
      %v291 = vld [vmem:[%s215 + $0x58] sm:$0xf]
      %v292 = vld [vmem:[%s215 + $0x5c] sm:$0xf]
      %v293 = vld [vmem:[%s215 + $0x60] sm:$0xf]
      %v294 = vld [vmem:[%s215 + $0x64] sm:$0xf]
      %v295 = vld [vmem:[%s215 + $0x68] sm:$0xf]
      %v296 = vld [vmem:[%s215 + $0x6c] sm:$0xf]
      %v297 = vld [vmem:[%s215 + $0x70] sm:$0xf]
      %v298 = vld [vmem:[%s215 + $0x74] sm:$0xf]
      %v299 = vld [vmem:[%s215 + $0x78] sm:$0xf]
      %v300 = vld [vmem:[%s215 + $0x7c] sm:$0xf]
      %v301 = vld [vmem:[%s215 + $0x80] sm:$0xf]
      %v302 = vld [vmem:[%s215 + $0x84] sm:$0xf]
      %v303 = vld [vmem:[%s215 + $0x88] sm:$0xf]
      %v304 = vld [vmem:[%s215 + $0x8c] sm:$0xf]
      %v305 = vld [vmem:[%s215 + $0x90] sm:$0xf]
      %v306 = vld [vmem:[%s215 + $0x94] sm:$0xf]
      %v307 = vld [vmem:[%s215 + $0x98] sm:$0xf]
      %v308 = vld [vmem:[%s215 + $0x9c] sm:$0xf]
      %v309 = vld [vmem:[%s215 + $0xa0] sm:$0xf]
      %v310 = vld [vmem:[%s215 + $0xa4] sm:$0xf]
      %v311 = vld [vmem:[%s215 + $0xa8] sm:$0xf]
      %v312 = vld [vmem:[%s215 + $0xac] sm:$0xf]
      %v313 = vld [vmem:[%s215 + $0xb0] sm:$0xf]
      %v314 = vld [vmem:[%s215 + $0xb4] sm:$0xf]
      %v315 = vld [vmem:[%s215 + $0xb8] sm:$0xf]
      %v316 = vld [vmem:[%s215 + $0xbc] sm:$0xf]
      %v317 = vld [vmem:[%s215 + $0xc0] sm:$0xf]
      %v318 = vld [vmem:[%s215 + $0xc4] sm:$0xf]
      %v319 = vld [vmem:[%s215 + $0xc8] sm:$0xf]
      %v320 = vld [vmem:[%s215 + $0xcc] sm:$0xf]
      %v321 = vld [vmem:[%s215 + $0xd0] sm:$0xf]
      %v322 = vld [vmem:[%s215 + $0xd4] sm:$0xf]
      %v323 = vld [vmem:[%s215 + $0xd8] sm:$0xf]
      %v324 = vld [vmem:[%s215 + $0xdc] sm:$0xf]
      %v325 = vld [vmem:[%s215 + $0xe0] sm:$0xf]
      %v326 = vld [vmem:[%s215 + $0xe4] sm:$0xf]
      %v327 = vld [vmem:[%s215 + $0xe8] sm:$0xf]
      %v328 = vld [vmem:[%s215 + $0xec] sm:$0xf]
      %v329 = vld [vmem:[%s215 + $0xf0] sm:$0xf]
      %v330 = vld [vmem:[%s215 + $0xf4] sm:$0xf]
      %v331 = vld [vmem:[%s215 + $0xf8] sm:$0xf]
      %v332 = vld [vmem:[%s215 + $0xfc] sm:$0xf]
      %v333 = vld [vmem:[%s215 + $0x100] sm:$0xf]
      %v334 = vld [vmem:[%s215 + $0x104] sm:$0xf]
      %v335 = vld [vmem:[%s215 + $0x108] sm:$0xf]
      %v336 = vld [vmem:[%s215 + $0x10c] sm:$0xf]
      %v337 = vld [vmem:[%s215 + $0x110] sm:$0xf]
      %v338 = vld [vmem:[%s215 + $0x114] sm:$0xf]
      %v339 = vld [vmem:[%s215 + $0x118] sm:$0xf]
      %v340 = vld [vmem:[%s215 + $0x11c] sm:$0xf]
      %v341 = vld [vmem:[%s215 + $0x120] sm:$0xf]
      %v342 = vld [vmem:[%s215 + $0x124] sm:$0xf]
      %v343 = vld [vmem:[%s215 + $0x128] sm:$0xf]
      %v344 = vld [vmem:[%s215 + $0x12c] sm:$0xf]
      %v345 = vld [vmem:[%s215 + $0x130] sm:$0xf]
      %v346 = vld [vmem:[%s215 + $0x134] sm:$0xf]
      %v347 = vld [vmem:[%s215 + $0x138] sm:$0xf]
      %v348 = vld [vmem:[%s215 + $0x13c] sm:$0xf]
      %v349 = vld [vmem:[%s215 + $0x140] sm:$0xf]
      %v350 = vld [vmem:[%s215 + $0x144] sm:$0xf]
      %v351 = vld [vmem:[%s215 + $0x148] sm:$0xf]
      %v352 = vld [vmem:[%s215 + $0x14c] sm:$0xf]
      %v353 = vld [vmem:[%s215 + $0x150] sm:$0xf]
      %v354 = vld [vmem:[%s215 + $0x154] sm:$0xf]
      %v355 = vld [vmem:[%s215 + $0x158] sm:$0xf]
      %v356 = vld [vmem:[%s215 + $0x15c] sm:$0xf]
      %v357 = vld [vmem:[%s215 + $0x160] sm:$0xf]
      %v358 = vld [vmem:[%s215 + $0x164] sm:$0xf]
      %v359 = vld [vmem:[%s215 + $0x168] sm:$0xf]
      %v360 = vld [vmem:[%s215 + $0x16c] sm:$0xf]
      %v361 = vld [vmem:[%s215 + $0x170] sm:$0xf]
      %v362 = vld [vmem:[%s215 + $0x174] sm:$0xf]
      %v363 = vld [vmem:[%s215 + $0x178] sm:$0xf]
      %v364 = vld [vmem:[%s215 + $0x17c] sm:$0xf]
      %v365 = vld [vmem:[%s215 + $0x180] sm:$0xf]
      %v366 = vld [vmem:[%s215 + $0x184] sm:$0xf]
      %v367 = vld [vmem:[%s215 + $0x188] sm:$0xf]
      %v368 = vld [vmem:[%s215 + $0x18c] sm:$0xf]
      %v369 = vld [vmem:[%s215 + $0x190] sm:$0xf]
      %v370 = vld [vmem:[%s215 + $0x194] sm:$0xf]
      %v371 = vld [vmem:[%s215 + $0x198] sm:$0xf]
      %v372 = vld [vmem:[%s215 + $0x19c] sm:$0xf]
      %v373 = vld [vmem:[%s215 + $0x1a0] sm:$0xf]
      %v374 = vld [vmem:[%s215 + $0x1a4] sm:$0xf]
      %v375 = vld [vmem:[%s215 + $0x1a8] sm:$0xf]
      %v376 = vld [vmem:[%s215 + $0x1ac] sm:$0xf]
      %v377 = vld [vmem:[%s215 + $0x1b0] sm:$0xf]
      %v378 = vld [vmem:[%s215 + $0x1b4] sm:$0xf]
      %v379 = vld [vmem:[%s215 + $0x1b8] sm:$0xf]
      %v380 = vld [vmem:[%s215 + $0x1bc] sm:$0xf]
      %v381 = vld [vmem:[%s215 + $0x1c0] sm:$0xf]
      %v382 = vld [vmem:[%s215 + $0x1c4] sm:$0xf]
      %v383 = vld [vmem:[%s215 + $0x1c8] sm:$0xf]
      %v384 = vld [vmem:[%s215 + $0x1cc] sm:$0xf]
      %v385 = vld [vmem:[%s215 + $0x1d0] sm:$0xf]
      %v386 = vld [vmem:[%s215 + $0x1d4] sm:$0xf]
      %v387 = vld [vmem:[%s215 + $0x1d8] sm:$0xf]
      %v388 = vld [vmem:[%s215 + $0x1dc] sm:$0xf]
      %v389 = vld [vmem:[%s215 + $0x1e0] sm:$0xf]
      %v390 = vld [vmem:[%s215 + $0x1e4] sm:$0xf]
      %v391 = vld [vmem:[%s215 + $0x1e8] sm:$0xf]
      %v392 = vld [vmem:[%s215 + $0x1ec] sm:$0xf]
      %v393 = vld [vmem:[%s215 + $0x1f0] sm:$0xf]
      %v394 = vld [vmem:[%s215 + $0x1f4] sm:$0xf]
      %v395 = vld [vmem:[%s215 + $0x1f8] sm:$0xf]
      %v396 = vld [vmem:[%s215 + $0x1fc] sm:$0xf]
      %v397 = vld [vmem:[%s215 + $0x200] sm:$0xf]
      %v398 = vld [vmem:[%s215 + $0x204] sm:$0xf]
      %v399 = vld [vmem:[%s215 + $0x208] sm:$0xf]
      %v400 = vld [vmem:[%s215 + $0x20c] sm:$0xf]
      %v401 = vld [vmem:[%s215 + $0x210] sm:$0xf]
      %v402 = vld [vmem:[%s215 + $0x214] sm:$0xf]
      %v403 = vld [vmem:[%s215 + $0x218] sm:$0xf]
      %v404 = vld [vmem:[%s215 + $0x21c] sm:$0xf]
      %v405 = vld [vmem:[%s215 + $0x220] sm:$0xf]
      %v406 = vld [vmem:[%s215 + $0x224] sm:$0xf]
      %v407 = vld [vmem:[%s215 + $0x228] sm:$0xf]
      %v408 = vld [vmem:[%s215 + $0x22c] sm:$0xf]
      %v409 = vld [vmem:[%s215 + $0x230] sm:$0xf]
      %v410 = vld [vmem:[%s215 + $0x234] sm:$0xf]
      %v411 = vld [vmem:[%s215 + $0x238] sm:$0xf]
      %v412 = vld [vmem:[%s215 + $0x23c] sm:$0xf]
      %v413 = vld [vmem:[%s218] sm:$0x1]
      %v415 = vlaneseq
      %v416 = vshrl.u32 %v415, 7
      %v417 = vsub.s32 0, %v416
      %v418 = vrot.slane %v413, %v417
      %v460 = vunpack.c.l.b16 %v229
      %v461 = vunpack.c.h.b16 %v229
      %v462 = vunpack.c.l.b16 %v230
      %v463 = vunpack.c.h.b16 %v230
      %v464 = vunpack.c.l.b16 %v231
      %v465 = vunpack.c.h.b16 %v231
      %v466 = vunpack.c.l.b16 %v232
      %v467 = vunpack.c.h.b16 %v232
      %v468 = vunpack.c.l.b16 %v233
      %v469 = vunpack.c.l.b16 %v234
      %v470 = vunpack.c.h.b16 %v234
      %v471 = vunpack.c.l.b16 %v235
      %v472 = vunpack.c.h.b16 %v235
      %v473 = vunpack.c.l.b16 %v236
      %v474 = vunpack.c.h.b16 %v236
      %v475 = vunpack.c.l.b16 %v237
      %v476 = vunpack.c.h.b16 %v237
      %v477 = vunpack.c.l.b16 %v238
      %v478 = vunpack.c.l.b16 %v239
      %v479 = vunpack.c.h.b16 %v239
      %v480 = vunpack.c.l.b16 %v240
      %v481 = vunpack.c.h.b16 %v240
      %v482 = vunpack.c.l.b16 %v241
      %v483 = vunpack.c.h.b16 %v241
      %v484 = vunpack.c.l.b16 %v242
      %v485 = vunpack.c.h.b16 %v242
      %v486 = vunpack.c.l.b16 %v243
      %v487 = vunpack.c.l.b16 %v244
      %v488 = vunpack.c.h.b16 %v244
      %v489 = vunpack.c.l.b16 %v245
      %v490 = vunpack.c.h.b16 %v245
      %v491 = vunpack.c.l.b16 %v246
      %v492 = vunpack.c.h.b16 %v246
      %v493 = vunpack.c.l.b16 %v247
      %v494 = vunpack.c.h.b16 %v247
      %v495 = vunpack.c.l.b16 %v248
      %v496 = vunpack.c.l.b16 %v249
      %v497 = vunpack.c.h.b16 %v249
      %v498 = vunpack.c.l.b16 %v250
      %v499 = vunpack.c.h.b16 %v250
      %v500 = vunpack.c.l.b16 %v251
      %v501 = vunpack.c.h.b16 %v251
      %v502 = vunpack.c.l.b16 %v252
      %v503 = vunpack.c.h.b16 %v252
      %v504 = vunpack.c.l.b16 %v253
      %v505 = vunpack.c.l.b16 %v254
      %v506 = vunpack.c.h.b16 %v254
      %v507 = vunpack.c.l.b16 %v255
      %v508 = vunpack.c.h.b16 %v255
      %v509 = vunpack.c.l.b16 %v256
      %v510 = vunpack.c.h.b16 %v256
      %v511 = vunpack.c.l.b16 %v257
      %v512 = vunpack.c.h.b16 %v257
      %v513 = vunpack.c.l.b16 %v258
      %v514 = vunpack.c.l.b16 %v259
      %v515 = vunpack.c.h.b16 %v259
      %v516 = vunpack.c.l.b16 %v260
      %v517 = vunpack.c.h.b16 %v260
      %v518 = vunpack.c.l.b16 %v261
      %v519 = vunpack.c.h.b16 %v261
      %v520 = vunpack.c.l.b16 %v262
      %v521 = vunpack.c.h.b16 %v262
      %v522 = vunpack.c.l.b16 %v263
      %v523 = vunpack.c.l.b16 %v264
      %v524 = vunpack.c.h.b16 %v264
      %v525 = vunpack.c.l.b16 %v265
      %v526 = vunpack.c.h.b16 %v265
      %v527 = vunpack.c.l.b16 %v266
      %v528 = vunpack.c.h.b16 %v266
      %v529 = vunpack.c.l.b16 %v267
      %v530 = vunpack.c.h.b16 %v267
      %v531 = vunpack.c.l.b16 %v268
      %v532 = vpack.c.b16 %v469, %v460
      %v533 = vpack.c.b16 %v470, %v461
      %v534 = vpack.c.b16 %v471, %v462
      %v535 = vpack.c.b16 %v472, %v463
      %v536 = vpack.c.b16 %v473, %v464
      %v537 = vpack.c.b16 %v474, %v465
      %v538 = vpack.c.b16 %v475, %v466
      %v539 = vpack.c.b16 %v476, %v467
      %v540 = vpack.c.b16 %v477, %v468
      %v541 = vpack.c.b16 %v487, %v478
      %v542 = vpack.c.b16 %v488, %v479
      %v543 = vpack.c.b16 %v489, %v480
      %v544 = vpack.c.b16 %v490, %v481
      %v545 = vpack.c.b16 %v491, %v482
      %v546 = vpack.c.b16 %v492, %v483
      %v547 = vpack.c.b16 %v493, %v484
      %v548 = vpack.c.b16 %v494, %v485
      %v549 = vpack.c.b16 %v495, %v486
      %v550 = vpack.c.b16 %v505, %v496
      %v551 = vpack.c.b16 %v506, %v497
      %v552 = vpack.c.b16 %v507, %v498
      %v553 = vpack.c.b16 %v508, %v499
      %v554 = vpack.c.b16 %v509, %v500
      %v555 = vpack.c.b16 %v510, %v501
      %v556 = vpack.c.b16 %v511, %v502
      %v557 = vpack.c.b16 %v512, %v503
      %v558 = vpack.c.b16 %v513, %v504
      %v559 = vpack.c.b16 %v523, %v514
      %v560 = vpack.c.b16 %v524, %v515
      %v561 = vpack.c.b16 %v525, %v516
      %v562 = vpack.c.b16 %v526, %v517
      %v563 = vpack.c.b16 %v527, %v518
      %v564 = vpack.c.b16 %v528, %v519
      %v565 = vpack.c.b16 %v529, %v520
      %v566 = vpack.c.b16 %v530, %v521
      %v567 = vpack.c.b16 %v531, %v522
      %v748 = vunpack.c.l.b16 %v269
      %v749 = vunpack.c.l.b16 %v270
      %v750 = vunpack.c.l.b16 %v271
      %v751 = vunpack.c.l.b16 %v272
      %v752 = vunpack.c.l.b16 %v273
      %v753 = vunpack.c.l.b16 %v274
      %v754 = vunpack.c.l.b16 %v275
      %v755 = vunpack.c.l.b16 %v276
      %v756 = vunpack.c.l.b16 %v277
      %v757 = vunpack.c.l.b16 %v278
      %v758 = vunpack.c.l.b16 %v279
      %v759 = vunpack.c.l.b16 %v280
      %v760 = vunpack.c.l.b16 %v281
      %v761 = vunpack.c.l.b16 %v282
      %v762 = vunpack.c.l.b16 %v283
      %v763 = vunpack.c.l.b16 %v284
      %v764 = vunpack.c.l.b16 %v285
      %v765 = vunpack.c.l.b16 %v286
      %v766 = vunpack.c.l.b16 %v287
      %v767 = vunpack.c.l.b16 %v288
      %v768 = vunpack.c.l.b16 %v289
      %v769 = vunpack.c.l.b16 %v290
      %v770 = vunpack.c.l.b16 %v291
      %v771 = vunpack.c.l.b16 %v292
      %v772 = vunpack.c.l.b16 %v293
      %v773 = vunpack.c.l.b16 %v294
      %v774 = vunpack.c.l.b16 %v295
      %v775 = vunpack.c.l.b16 %v296
      %v776 = vunpack.c.l.b16 %v297
      %v777 = vunpack.c.l.b16 %v298
      %v778 = vunpack.c.l.b16 %v299
      %v779 = vunpack.c.l.b16 %v300
      %v780 = vunpack.c.l.b16 %v301
      %v781 = vunpack.c.l.b16 %v302
      %v782 = vunpack.c.l.b16 %v303
      %v783 = vunpack.c.l.b16 %v304
      %v784 = vunpack.c.l.b16 %v305
      %v785 = vunpack.c.l.b16 %v306
      %v786 = vunpack.c.l.b16 %v307
      %v787 = vunpack.c.l.b16 %v308
      %v788 = vunpack.c.l.b16 %v309
      %v789 = vunpack.c.l.b16 %v310
      %v790 = vunpack.c.l.b16 %v311
      %v791 = vunpack.c.l.b16 %v312
      %v792 = vunpack.c.l.b16 %v313
      %v793 = vunpack.c.l.b16 %v314
      %v794 = vunpack.c.l.b16 %v315
      %v795 = vunpack.c.l.b16 %v316
      %v796 = vunpack.c.l.b16 %v317
      %v797 = vunpack.c.l.b16 %v318
      %v798 = vunpack.c.l.b16 %v319
      %v799 = vunpack.c.l.b16 %v320
      %v800 = vunpack.c.l.b16 %v321
      %v801 = vunpack.c.l.b16 %v322
      %v802 = vunpack.c.l.b16 %v323
      %v803 = vunpack.c.l.b16 %v324
      %v804 = vunpack.c.l.b16 %v325
      %v805 = vunpack.c.l.b16 %v326
      %v806 = vunpack.c.l.b16 %v327
      %v807 = vunpack.c.l.b16 %v328
      %v808 = vunpack.c.l.b16 %v329
      %v809 = vunpack.c.l.b16 %v330
      %v810 = vunpack.c.l.b16 %v331
      %v811 = vunpack.c.l.b16 %v332
      %v812 = vunpack.c.l.b16 %v333
      %v813 = vunpack.c.l.b16 %v334
      %v814 = vunpack.c.l.b16 %v335
      %v815 = vunpack.c.l.b16 %v336
      %v816 = vunpack.c.l.b16 %v337
      %v817 = vunpack.c.l.b16 %v338
      %v818 = vunpack.c.l.b16 %v339
      %v819 = vunpack.c.l.b16 %v340
      %v820 = vunpack.c.l.b16 %v341
      %v821 = vunpack.c.l.b16 %v342
      %v822 = vunpack.c.l.b16 %v343
      %v823 = vunpack.c.l.b16 %v344
      %v824 = vunpack.c.l.b16 %v345
      %v825 = vunpack.c.l.b16 %v346
      %v826 = vunpack.c.l.b16 %v347
      %v827 = vunpack.c.l.b16 %v348
      %v828 = vunpack.c.l.b16 %v349
      %v829 = vunpack.c.l.b16 %v350
      %v830 = vunpack.c.l.b16 %v351
      %v831 = vunpack.c.l.b16 %v352
      %v832 = vunpack.c.l.b16 %v353
      %v833 = vunpack.c.l.b16 %v354
      %v834 = vunpack.c.l.b16 %v355
      %v835 = vunpack.c.l.b16 %v356
      %v836 = vunpack.c.l.b16 %v357
      %v837 = vunpack.c.l.b16 %v358
      %v838 = vunpack.c.l.b16 %v359
      %v839 = vunpack.c.l.b16 %v360
      %v840 = vunpack.c.l.b16 %v361
      %v841 = vunpack.c.l.b16 %v362
      %v842 = vunpack.c.l.b16 %v363
      %v843 = vunpack.c.l.b16 %v364
      %v844 = vunpack.c.l.b16 %v365
      %v845 = vunpack.c.l.b16 %v366
      %v846 = vunpack.c.l.b16 %v367
      %v847 = vunpack.c.l.b16 %v368
      %v848 = vunpack.c.l.b16 %v369
      %v849 = vunpack.c.l.b16 %v370
      %v850 = vunpack.c.l.b16 %v371
      %v851 = vunpack.c.l.b16 %v372
      %v852 = vunpack.c.l.b16 %v373
      %v853 = vunpack.c.l.b16 %v374
      %v854 = vunpack.c.l.b16 %v375
      %v855 = vunpack.c.l.b16 %v376
      %v856 = vunpack.c.l.b16 %v377
      %v857 = vunpack.c.l.b16 %v378
      %v858 = vunpack.c.l.b16 %v379
      %v859 = vunpack.c.l.b16 %v380
      %v860 = vunpack.c.l.b16 %v381
      %v861 = vunpack.c.l.b16 %v382
      %v862 = vunpack.c.l.b16 %v383
      %v863 = vunpack.c.l.b16 %v384
      %v864 = vunpack.c.l.b16 %v385
      %v865 = vunpack.c.l.b16 %v386
      %v866 = vunpack.c.l.b16 %v387
      %v867 = vunpack.c.l.b16 %v388
      %v868 = vunpack.c.l.b16 %v389
      %v869 = vunpack.c.l.b16 %v390
      %v870 = vunpack.c.l.b16 %v391
      %v871 = vunpack.c.l.b16 %v392
      %v872 = vunpack.c.l.b16 %v393
      %v873 = vunpack.c.l.b16 %v394
      %v874 = vunpack.c.l.b16 %v395
      %v875 = vunpack.c.l.b16 %v396
      %v876 = vunpack.c.l.b16 %v397
      %v877 = vunpack.c.l.b16 %v398
      %v878 = vunpack.c.l.b16 %v399
      %v879 = vunpack.c.l.b16 %v400
      %v880 = vunpack.c.l.b16 %v401
      %v881 = vunpack.c.l.b16 %v402
      %v882 = vunpack.c.l.b16 %v403
      %v883 = vunpack.c.l.b16 %v404
      %v884 = vunpack.c.l.b16 %v405
      %v885 = vunpack.c.l.b16 %v406
      %v886 = vunpack.c.l.b16 %v407
      %v887 = vunpack.c.l.b16 %v408
      %v888 = vunpack.c.l.b16 %v409
      %v889 = vunpack.c.l.b16 %v410
      %v890 = vunpack.c.l.b16 %v411
      %v891 = vunpack.c.l.b16 %v412
      %v892 = vpack.c.b16 %v749, %v748
      %v893 = vpack.c.b16 %v751, %v750
      %v894 = vpack.c.b16 %v753, %v752
      %v895 = vpack.c.b16 %v755, %v754
      %v896 = vpack.c.b16 %v757, %v756
      %v897 = vpack.c.b16 %v759, %v758
      %v898 = vpack.c.b16 %v761, %v760
      %v899 = vpack.c.b16 %v763, %v762
      %v900 = vpack.c.b16 %v765, %v764
      %v901 = vpack.c.b16 %v767, %v766
      %v902 = vpack.c.b16 %v769, %v768
      %v903 = vpack.c.b16 %v771, %v770
      %v904 = vpack.c.b16 %v773, %v772
      %v905 = vpack.c.b16 %v775, %v774
      %v906 = vpack.c.b16 %v777, %v776
      %v907 = vpack.c.b16 %v779, %v778
      %v908 = vpack.c.b16 %v781, %v780
      %v909 = vpack.c.b16 %v783, %v782
      %v910 = vpack.c.b16 %v785, %v784
      %v911 = vpack.c.b16 %v787, %v786
      %v912 = vpack.c.b16 %v789, %v788
      %v913 = vpack.c.b16 %v791, %v790
      %v914 = vpack.c.b16 %v793, %v792
      %v915 = vpack.c.b16 %v795, %v794
      %v916 = vpack.c.b16 %v797, %v796
      %v917 = vpack.c.b16 %v799, %v798
      %v918 = vpack.c.b16 %v801, %v800
      %v919 = vpack.c.b16 %v803, %v802
      %v920 = vpack.c.b16 %v805, %v804
      %v921 = vpack.c.b16 %v807, %v806
      %v922 = vpack.c.b16 %v809, %v808
      %v923 = vpack.c.b16 %v811, %v810
      %v924 = vpack.c.b16 %v813, %v812
      %v925 = vpack.c.b16 %v815, %v814
      %v926 = vpack.c.b16 %v817, %v816
      %v927 = vpack.c.b16 %v819, %v818
      %v928 = vpack.c.b16 %v821, %v820
      %v929 = vpack.c.b16 %v823, %v822
      %v930 = vpack.c.b16 %v825, %v824
      %v931 = vpack.c.b16 %v827, %v826
      %v932 = vpack.c.b16 %v829, %v828
      %v933 = vpack.c.b16 %v831, %v830
      %v934 = vpack.c.b16 %v833, %v832
      %v935 = vpack.c.b16 %v835, %v834
      %v936 = vpack.c.b16 %v837, %v836
      %v937 = vpack.c.b16 %v839, %v838
      %v938 = vpack.c.b16 %v841, %v840
      %v939 = vpack.c.b16 %v843, %v842
      %v940 = vpack.c.b16 %v845, %v844
      %v941 = vpack.c.b16 %v847, %v846
      %v942 = vpack.c.b16 %v849, %v848
      %v943 = vpack.c.b16 %v851, %v850
      %v944 = vpack.c.b16 %v853, %v852
      %v945 = vpack.c.b16 %v855, %v854
      %v946 = vpack.c.b16 %v857, %v856
      %v947 = vpack.c.b16 %v859, %v858
      %v948 = vpack.c.b16 %v861, %v860
      %v949 = vpack.c.b16 %v863, %v862
      %v950 = vpack.c.b16 %v865, %v864
      %v951 = vpack.c.b16 %v867, %v866
      %v952 = vpack.c.b16 %v869, %v868
      %v953 = vpack.c.b16 %v871, %v870
      %v954 = vpack.c.b16 %v873, %v872
      %v955 = vpack.c.b16 %v875, %v874
      %v956 = vpack.c.b16 %v877, %v876
      %v957 = vpack.c.b16 %v879, %v878
      %v958 = vpack.c.b16 %v881, %v880
      %v959 = vpack.c.b16 %v883, %v882
      %v960 = vpack.c.b16 %v885, %v884
      %v961 = vpack.c.b16 %v887, %v886
      %v962 = vpack.c.b16 %v889, %v888
      %v963 = vpack.c.b16 %v891, %v890
      %1036 = vmatprep.subr.bf16.mxu0 0
      %1037 = vmatpush1.bf16.msra.mxu0 %v892
      %1038 = vmatprep.subr.bf16.mxu0 0
      %1039 = vmatpush1.bf16.msra.mxu0 %v893
      %1040 = vmatprep.subr.bf16.mxu0 0
      %1041 = vmatpush1.bf16.msra.mxu0 %v894
      %1042 = vmatprep.subr.bf16.mxu0 0
      %1043 = vmatpush1.bf16.msra.mxu0 %v895
      %1044 = vmatprep.subr.bf16.mxu0 0
      %1045 = vmatpush1.bf16.msra.mxu0 %v896
      %1046 = vmatprep.subr.bf16.mxu0 0
      %1047 = vmatpush1.bf16.msra.mxu0 %v897
      %1048 = vmatprep.subr.bf16.mxu0 0
      %1049 = vmatpush1.bf16.msra.mxu0 %v898
      %1050 = vmatprep.subr.bf16.mxu0 0
      %1051 = vmatpush1.bf16.msra.mxu0 %v899
      %1052 = vmatprep.subr.bf16.mxu0 0
      %1053 = vmatpush1.bf16.msra.mxu0 %v900
      %1054 = vmatprep.subr.bf16.mxu0 0
      %1055 = vmatpush1.bf16.msra.mxu0 %v901
      %1056 = vmatprep.subr.bf16.mxu0 0
      %1057 = vmatpush1.bf16.msra.mxu0 %v902
      %1058 = vmatprep.subr.bf16.mxu0 0
      %1059 = vmatpush1.bf16.msra.mxu0 %v903
      %1060 = vmatprep.subr.bf16.mxu0 0
      %1061 = vmatpush1.bf16.msra.mxu0 %v904
      %1062 = vmatprep.subr.bf16.mxu0 0
      %1063 = vmatpush1.bf16.msra.mxu0 %v905
      %1064 = vmatprep.subr.bf16.mxu0 0
      %1065 = vmatpush1.bf16.msra.mxu0 %v906
      %1066 = vmatprep.subr.bf16.mxu0 0
      %1067 = vmatpush1.bf16.msra.mxu0 %v907
      %1068 = vmatprep.mubr.bf16.mxu0 %v533
      %1069 = vmatmul.mubr.bf16.gmra.mrb[0].mxu0 %v532
      %v1070 = vpop.f32.mrb[0].mxu0
      %v1071 = vadd.f32 %v418, %v1070
      %v1072 = vpop.f32.mrb[0].mxu0
      %v1073 = vpop.f32.mrb[0].mxu0
      %v1074 = vadd.f32 %v418, %v1073
      %v1075 = vpop.f32.mrb[0].mxu0
      %1076 = vmatprep.mubr.bf16.mxu0 %v542
      %1077 = vmatmul.mubr.bf16.gmra.mrb[0].mxu0 %v541
      %v1078 = vpop.f32.mrb[0].mxu0
      %v1079 = vadd.f32 %v418, %v1078
      %v1080 = vpop.f32.mrb[0].mxu0
      %v1081 = vpop.f32.mrb[0].mxu0
      %v1082 = vadd.f32 %v418, %v1081
      %v1083 = vpop.f32.mrb[0].mxu0
      %1084 = vmatprep.mubr.bf16.mxu0 %v551
      %1085 = vmatmul.mubr.bf16.gmra.mrb[0].mxu0 %v550
      %v1086 = vpop.f32.mrb[0].mxu0
      %v1087 = vadd.f32 %v418, %v1086
      %v1088 = vpop.f32.mrb[0].mxu0
      %v1089 = vpop.f32.mrb[0].mxu0
      %v1090 = vadd.f32 %v418, %v1089
      %v1091 = vpop.f32.mrb[0].mxu0
      %1092 = vmatprep.mubr.bf16.mxu0 %v560
      %1093 = vmatmul.mubr.bf16.gmra.mrb[0].mxu0 %v559
      %v1094 = vpop.f32.mrb[0].mxu0
      %v1095 = vadd.f32 %v418, %v1094
      %v1096 = vpop.f32.mrb[0].mxu0
      %v1097 = vpop.f32.mrb[0].mxu0
      %v1098 = vadd.f32 %v418, %v1097
      %v1099 = vpop.f32.mrb[0].mxu0
      %1100 = vdwg.mxu0
      %1101 = vmatprep.subr.bf16.mxu0 0
      %1102 = vmatpush1.bf16.msra.mxu0 %v908
      %1103 = vmatprep.subr.bf16.mxu0 0
      %1104 = vmatpush1.bf16.msra.mxu0 %v909
      %1105 = vmatprep.subr.bf16.mxu0 0
      %1106 = vmatpush1.bf16.msra.mxu0 %v910
      %1107 = vmatprep.subr.bf16.mxu0 0
      %1108 = vmatpush1.bf16.msra.mxu0 %v911
      %1109 = vmatprep.subr.bf16.mxu0 0
      %1110 = vmatpush1.bf16.msra.mxu0 %v912
      %1111 = vmatprep.subr.bf16.mxu0 0
      %1112 = vmatpush1.bf16.msra.mxu0 %v913
      %1113 = vmatprep.subr.bf16.mxu0 0
      %1114 = vmatpush1.bf16.msra.mxu0 %v914
      %1115 = vmatprep.subr.bf16.mxu0 0
      %1116 = vmatpush1.bf16.msra.mxu0 %v915
      %1117 = vmatprep.subr.bf16.mxu0 0
      %1118 = vmatpush1.bf16.msra.mxu0 %v916
      %1119 = vmatprep.subr.bf16.mxu0 0
      %1120 = vmatpush1.bf16.msra.mxu0 %v917
      %1121 = vmatprep.subr.bf16.mxu0 0
      %1122 = vmatpush1.bf16.msra.mxu0 %v918
      %1123 = vmatprep.subr.bf16.mxu0 0
      %1124 = vmatpush1.bf16.msra.mxu0 %v919
      %1125 = vmatprep.subr.bf16.mxu0 0
      %1126 = vmatpush1.bf16.msra.mxu0 %v920
      %1127 = vmatprep.subr.bf16.mxu0 0
      %1128 = vmatpush1.bf16.msra.mxu0 %v921
      %1129 = vmatprep.subr.bf16.mxu0 0
      %1130 = vmatpush1.bf16.msra.mxu0 %v922
      %1131 = vmatprep.subr.bf16.mxu0 0
      %1132 = vmatpush1.bf16.msra.mxu0 %v923
      %1133 = vmatprep.mubr.bf16.mxu0 %v535
      %1134 = vmatmul.mubr.bf16.gmra.mrb[0].mxu0 %v534
      %v1135 = vpop.f32.mrb[0].mxu0
      %v1136 = vadd.f32 %v1071, %v1135
      %v1137 = vpop.f32.mrb[0].mxu0
      %v1138 = vpop.f32.mrb[0].mxu0
      %v1139 = vadd.f32 %v1074, %v1138
      %v1140 = vpop.f32.mrb[0].mxu0
      %1141 = vmatprep.mubr.bf16.mxu0 %v544
      %1142 = vmatmul.mubr.bf16.gmra.mrb[0].mxu0 %v543
      %v1143 = vpop.f32.mrb[0].mxu0
      %v1144 = vadd.f32 %v1079, %v1143
      %v1145 = vpop.f32.mrb[0].mxu0
      %v1146 = vpop.f32.mrb[0].mxu0
      %v1147 = vadd.f32 %v1082, %v1146
      %v1148 = vpop.f32.mrb[0].mxu0
      %1149 = vmatprep.mubr.bf16.mxu0 %v553
      %1150 = vmatmul.mubr.bf16.gmra.mrb[0].mxu0 %v552
      %v1151 = vpop.f32.mrb[0].mxu0
      %v1152 = vadd.f32 %v1087, %v1151
      %v1153 = vpop.f32.mrb[0].mxu0
      %v1154 = vpop.f32.mrb[0].mxu0
      %v1155 = vadd.f32 %v1090, %v1154
      %v1156 = vpop.f32.mrb[0].mxu0
      %1157 = vmatprep.mubr.bf16.mxu0 %v562
      %1158 = vmatmul.mubr.bf16.gmra.mrb[0].mxu0 %v561
      %v1159 = vpop.f32.mrb[0].mxu0
      %v1160 = vadd.f32 %v1095, %v1159
      %v1161 = vpop.f32.mrb[0].mxu0
      %v1162 = vpop.f32.mrb[0].mxu0
      %v1163 = vadd.f32 %v1098, %v1162
      %v1164 = vpop.f32.mrb[0].mxu0
      %1165 = vdwg.mxu0
      %1166 = vmatprep.subr.bf16.mxu0 0
      %1167 = vmatpush1.bf16.msra.mxu0 %v924
      %1168 = vmatprep.subr.bf16.mxu0 0
      %1169 = vmatpush1.bf16.msra.mxu0 %v925
      %1170 = vmatprep.subr.bf16.mxu0 0
      %1171 = vmatpush1.bf16.msra.mxu0 %v926
      %1172 = vmatprep.subr.bf16.mxu0 0
      %1173 = vmatpush1.bf16.msra.mxu0 %v927
      %1174 = vmatprep.subr.bf16.mxu0 0
      %1175 = vmatpush1.bf16.msra.mxu0 %v928
      %1176 = vmatprep.subr.bf16.mxu0 0
      %1177 = vmatpush1.bf16.msra.mxu0 %v929
      %1178 = vmatprep.subr.bf16.mxu0 0
      %1179 = vmatpush1.bf16.msra.mxu0 %v930
      %1180 = vmatprep.subr.bf16.mxu0 0
      %1181 = vmatpush1.bf16.msra.mxu0 %v931
      %1182 = vmatprep.subr.bf16.mxu0 0
      %1183 = vmatpush1.bf16.msra.mxu0 %v932
      %1184 = vmatprep.subr.bf16.mxu0 0
      %1185 = vmatpush1.bf16.msra.mxu0 %v933
      %1186 = vmatprep.subr.bf16.mxu0 0
      %1187 = vmatpush1.bf16.msra.mxu0 %v934
      %1188 = vmatprep.subr.bf16.mxu0 0
      %1189 = vmatpush1.bf16.msra.mxu0 %v935
      %1190 = vmatprep.subr.bf16.mxu0 0
      %1191 = vmatpush1.bf16.msra.mxu0 %v936
      %1192 = vmatprep.subr.bf16.mxu0 0
      %1193 = vmatpush1.bf16.msra.mxu0 %v937
      %1194 = vmatprep.subr.bf16.mxu0 0
      %1195 = vmatpush1.bf16.msra.mxu0 %v938
      %1196 = vmatprep.subr.bf16.mxu0 0
      %1197 = vmatpush1.bf16.msra.mxu0 %v939
      %1198 = vmatprep.mubr.bf16.mxu0 %v537
      %1199 = vmatmul.mubr.bf16.gmra.mrb[0].mxu0 %v536
      %v1200 = vpop.f32.mrb[0].mxu0
      %v1201 = vadd.f32 %v1136, %v1200
      %v1202 = vpop.f32.mrb[0].mxu0
      %v1203 = vpop.f32.mrb[0].mxu0
      %v1204 = vadd.f32 %v1139, %v1203
      %v1205 = vpop.f32.mrb[0].mxu0
      %1206 = vmatprep.mubr.bf16.mxu0 %v546
      %1207 = vmatmul.mubr.bf16.gmra.mrb[0].mxu0 %v545
      %v1208 = vpop.f32.mrb[0].mxu0
      %v1209 = vadd.f32 %v1144, %v1208
      %v1210 = vpop.f32.mrb[0].mxu0
      %v1211 = vpop.f32.mrb[0].mxu0
      %v1212 = vadd.f32 %v1147, %v1211
      %v1213 = vpop.f32.mrb[0].mxu0
      %1214 = vmatprep.mubr.bf16.mxu0 %v555
      %1215 = vmatmul.mubr.bf16.gmra.mrb[0].mxu0 %v554
      %v1216 = vpop.f32.mrb[0].mxu0
      %v1217 = vadd.f32 %v1152, %v1216
      %v1218 = vpop.f32.mrb[0].mxu0
      %v1219 = vpop.f32.mrb[0].mxu0
      %v1220 = vadd.f32 %v1155, %v1219
      %v1221 = vpop.f32.mrb[0].mxu0
      %1222 = vmatprep.mubr.bf16.mxu0 %v564
      %1223 = vmatmul.mubr.bf16.gmra.mrb[0].mxu0 %v563
      %v1224 = vpop.f32.mrb[0].mxu0
      %v1225 = vadd.f32 %v1160, %v1224
      %v1226 = vpop.f32.mrb[0].mxu0
      %v1227 = vpop.f32.mrb[0].mxu0
      %v1228 = vadd.f32 %v1163, %v1227
      %v1229 = vpop.f32.mrb[0].mxu0
      %1230 = vdwg.mxu0
      %1231 = vmatprep.subr.bf16.mxu0 0
      %1232 = vmatpush1.bf16.msra.mxu0 %v940
      %1233 = vmatprep.subr.bf16.mxu0 0
      %1234 = vmatpush1.bf16.msra.mxu0 %v941
      %1235 = vmatprep.subr.bf16.mxu0 0
      %1236 = vmatpush1.bf16.msra.mxu0 %v942
      %1237 = vmatprep.subr.bf16.mxu0 0
      %1238 = vmatpush1.bf16.msra.mxu0 %v943
      %1239 = vmatprep.subr.bf16.mxu0 0
      %1240 = vmatpush1.bf16.msra.mxu0 %v944
      %1241 = vmatprep.subr.bf16.mxu0 0
      %1242 = vmatpush1.bf16.msra.mxu0 %v945
      %1243 = vmatprep.subr.bf16.mxu0 0
      %1244 = vmatpush1.bf16.msra.mxu0 %v946
      %1245 = vmatprep.subr.bf16.mxu0 0
      %1246 = vmatpush1.bf16.msra.mxu0 %v947
      %1247 = vmatprep.subr.bf16.mxu0 0
      %1248 = vmatpush1.bf16.msra.mxu0 %v948
      %1249 = vmatprep.subr.bf16.mxu0 0
      %1250 = vmatpush1.bf16.msra.mxu0 %v949
      %1251 = vmatprep.subr.bf16.mxu0 0
      %1252 = vmatpush1.bf16.msra.mxu0 %v950
      %1253 = vmatprep.subr.bf16.mxu0 0
      %1254 = vmatpush1.bf16.msra.mxu0 %v951
      %1255 = vmatprep.subr.bf16.mxu0 0
      %1256 = vmatpush1.bf16.msra.mxu0 %v952
      %1257 = vmatprep.subr.bf16.mxu0 0
      %1258 = vmatpush1.bf16.msra.mxu0 %v953
      %1259 = vmatprep.subr.bf16.mxu0 0
      %1260 = vmatpush1.bf16.msra.mxu0 %v954
      %1261 = vmatprep.subr.bf16.mxu0 0
      %1262 = vmatpush1.bf16.msra.mxu0 %v955
      %1263 = vmatprep.mubr.bf16.mxu0 %v539
      %1264 = vmatmul.mubr.bf16.gmra.mrb[0].mxu0 %v538
      %v1265 = vpop.f32.mrb[0].mxu0
      %v1266 = vadd.f32 %v1201, %v1265
      %v1267 = vpop.f32.mrb[0].mxu0
      %v1268 = vpop.f32.mrb[0].mxu0
      %v1269 = vadd.f32 %v1204, %v1268
      %v1270 = vpop.f32.mrb[0].mxu0
      %1271 = vmatprep.mubr.bf16.mxu0 %v548
      %1272 = vmatmul.mubr.bf16.gmra.mrb[0].mxu0 %v547
      %v1273 = vpop.f32.mrb[0].mxu0
      %v1274 = vadd.f32 %v1209, %v1273
      %v1275 = vpop.f32.mrb[0].mxu0
      %v1276 = vpop.f32.mrb[0].mxu0
      %v1277 = vadd.f32 %v1212, %v1276
      %v1278 = vpop.f32.mrb[0].mxu0
      %1279 = vmatprep.mubr.bf16.mxu0 %v557
      %1280 = vmatmul.mubr.bf16.gmra.mrb[0].mxu0 %v556
      %v1281 = vpop.f32.mrb[0].mxu0
      %v1282 = vadd.f32 %v1217, %v1281
      %v1283 = vpop.f32.mrb[0].mxu0
      %v1284 = vpop.f32.mrb[0].mxu0
      %v1285 = vadd.f32 %v1220, %v1284
      %v1286 = vpop.f32.mrb[0].mxu0
      %1287 = vmatprep.mubr.bf16.mxu0 %v566
      %1288 = vmatmul.mubr.bf16.gmra.mrb[0].mxu0 %v565
      %v1289 = vpop.f32.mrb[0].mxu0
      %v1290 = vadd.f32 %v1225, %v1289
      %v1291 = vpop.f32.mrb[0].mxu0
      %v1292 = vpop.f32.mrb[0].mxu0
      %v1293 = vadd.f32 %v1228, %v1292
      %v1294 = vpop.f32.mrb[0].mxu0
      %1295 = vdwg.mxu0
      %1296 = vmatprep.subr.bf16.mxu0 0
      %1297 = vmatpush1.bf16.msra.mxu0 %v956
      %1298 = vmatprep.subr.bf16.mxu0 0
      %1299 = vmatpush1.bf16.msra.mxu0 %v957
      %1300 = vmatprep.subr.bf16.mxu0 0
      %1301 = vmatpush1.bf16.msra.mxu0 %v958
      %1302 = vmatprep.subr.bf16.mxu0 0
      %1303 = vmatpush1.bf16.msra.mxu0 %v959
      %1304 = vmatprep.subr.bf16.mxu0 0
      %1305 = vmatpush1.bf16.msra.mxu0 %v960
      %1306 = vmatprep.subr.bf16.mxu0 0
      %1307 = vmatpush1.bf16.msra.mxu0 %v961
      %1308 = vmatprep.subr.bf16.mxu0 0
      %1309 = vmatpush1.bf16.msra.mxu0 %v962
      %1310 = vmatprep.subr.bf16.mxu0 0
      %1311 = vmatpush1.bf16.msra.mxu0 %v963
      %1312 = vmatprep.subr.bf16.mxu0 0
      %1313 = vmatpush1.bf16.msra.mxu0 0
      %1314 = vmatprep.subr.bf16.mxu0 0
      %1315 = vmatpush1.bf16.msra.mxu0 0
      %1316 = vmatprep.subr.bf16.mxu0 0
      %1317 = vmatpush1.bf16.msra.mxu0 0
      %1318 = vmatprep.subr.bf16.mxu0 0
      %1319 = vmatpush1.bf16.msra.mxu0 0
      %1320 = vmatprep.subr.bf16.mxu0 0
      %1321 = vmatpush1.bf16.msra.mxu0 0
      %1322 = vmatprep.subr.bf16.mxu0 0
      %1323 = vmatpush1.bf16.msra.mxu0 0
      %1324 = vmatprep.subr.bf16.mxu0 0
      %1325 = vmatpush1.bf16.msra.mxu0 0
      %1326 = vmatprep.subr.bf16.mxu0 0
      %1327 = vmatpush1.bf16.msra.mxu0 0
      %1328 = vmatprep.mubr.bf16.mxu0 0
      %1329 = vmatmul.mubr.bf16.gmra.mrb[0].mxu0 %v540
      %v1330 = vpop.f32.mrb[0].mxu0
      %v1331 = vadd.f32 %v1266, %v1330
      %v1332 = vpop.f32.mrb[0].mxu0
      %v1333 = vpop.f32.mrb[0].mxu0
      %v1334 = vadd.f32 %v1269, %v1333
      %v1335 = vpop.f32.mrb[0].mxu0
      %1336 = vmatprep.mubr.bf16.mxu0 0
      %1337 = vmatmul.mubr.bf16.gmra.mrb[0].mxu0 %v549
      %v1338 = vpop.f32.mrb[0].mxu0
      %v1339 = vadd.f32 %v1274, %v1338
      %v1340 = vpop.f32.mrb[0].mxu0
      %v1341 = vpop.f32.mrb[0].mxu0
      %v1342 = vadd.f32 %v1277, %v1341
      %v1343 = vpop.f32.mrb[0].mxu0
      %1344 = vmatprep.mubr.bf16.mxu0 0
      %1345 = vmatmul.mubr.bf16.gmra.mrb[0].mxu0 %v558
      %v1346 = vpop.f32.mrb[0].mxu0
      %v1347 = vadd.f32 %v1282, %v1346
      %v1348 = vpop.f32.mrb[0].mxu0
      %v1349 = vpop.f32.mrb[0].mxu0
      %v1350 = vadd.f32 %v1285, %v1349
      %v1351 = vpop.f32.mrb[0].mxu0
      %1352 = vmatprep.mubr.bf16.mxu0 0
      %1353 = vmatmul.mubr.bf16.gmra.mrb[0].mxu0 %v567
      %v1354 = vpop.f32.mrb[0].mxu0
      %v1355 = vadd.f32 %v1290, %v1354
      %v1356 = vpop.f32.mrb[0].mxu0
      %v1357 = vpop.f32.mrb[0].mxu0
      %v1358 = vadd.f32 %v1293, %v1357
      %v1359 = vpop.f32.mrb[0].mxu0
      %1360 = vdwg.mxu0
      %v1361 = vmax.f32 %v1331, 0.0
      %v1362 = vmax.f32 %v1334, 0.0
      %v1363 = vmax.f32 %v1339, 0.0
      %v1364 = vmax.f32 %v1342, 0.0
      %v1365 = vmax.f32 %v1347, 0.0
      %v1366 = vmax.f32 %v1350, 0.0
      %v1367 = vmax.f32 %v1355, 0.0
      %v1368 = vmax.f32 %v1358, 0.0
      %v1369 = vpack.c.bf16 %v1362, %v1361
      %v1370 = vpack.c.bf16 %v1364, %v1363
      %v1371 = vpack.c.bf16 %v1366, %v1365
      %v1372 = vpack.c.bf16 %v1368, %v1367
      %v1377 = vunpack.c.l.b16 %v1369
      %v1378 = vunpack.c.h.b16 %v1369
      %v1379 = vunpack.c.l.b16 %v1370
      %v1380 = vunpack.c.h.b16 %v1370
      %v1381 = vunpack.c.l.b16 %v1371
      %v1382 = vunpack.c.h.b16 %v1371
      %v1383 = vunpack.c.l.b16 %v1372
      %v1384 = vunpack.c.h.b16 %v1372
      %v1385 = vpack.c.b16 %v1377, %v1377
      %v1386 = vpack.c.b16 %v1378, %v1378
      %v1387 = vpack.c.b16 %v1379, %v1379
      %v1388 = vpack.c.b16 %v1380, %v1380
      %v1389 = vpack.c.b16 %v1381, %v1381
      %v1390 = vpack.c.b16 %v1382, %v1382
      %v1391 = vpack.c.b16 %v1383, %v1383
      %v1392 = vpack.c.b16 %v1384, %v1384
      %1401 = vst [vmem:[%s226] sm:$0xf] %v1385
      %1402 = vst [vmem:[%s226 + $0x4] sm:$0xf] %v1386
      %1403 = vst [vmem:[%s226 + $0x8] sm:$0xf] %v1387
      %1404 = vst [vmem:[%s226 + $0xc] sm:$0xf] %v1388
      %1405 = vst [vmem:[%s226 + $0x10] sm:$0xf] %v1389
      %1406 = vst [vmem:[%s226 + $0x14] sm:$0xf] %v1390
      %1407 = vst [vmem:[%s226 + $0x18] sm:$0xf] %v1391
      %1408 = vst [vmem:[%s226 + $0x1c] sm:$0xf] %v1392
      %s1409 = smul.u32 8, %s18
      %p1410 = scmp.lt.s32.totalorder %s1409, 15
      %s1411 = scalar_select %p1410, %s1409, 15
      %p1412 = scmp.lt.s32.totalorder %s19, 0
      %s1413 = scalar_select %p1412, %s19, 0
      %s1414 = sadd.s32 %s1413, %s1411
      %s1415 = smul.addr %s1414, 4
      %s1416 = scalar_lea.vmem %s3, %s1415
      // Predicated region
      $region33: #{bottleneck_forward.4} parent=31 // pred_check
        %p1417 = pneg %p124
      $region34: #{bottleneck_forward.4} parent=31 // pred_check_branch
        %1419 = sbr.rel (%p1417) target = $region36
      $region35: #{bottleneck_forward.4} parent=31 // pred_region
        %s1420 = smul.u32 8, %s18
      $region36: #{bottleneck_forward.4} parent=31 // pred_fallthru
        _
    $region32: #{bottleneck_forward.4} parent=5 // pred_fallthru
      _
    %p1421 = scmp.le.s32.totalorder 2, %s9
    // Predicated region
    $region37: #{bottleneck_forward.4} parent=5 // pred_check
      %p1422 = pneg %p1421
    $region38: #{bottleneck_forward.4} parent=5 // pred_check_branch
      %1424 = sbr.rel (%p1422) target = $region40
    $region39: #{bottleneck_forward.4} parent=5 // pred_region
      %s1425 = ssub.s32 %s9, 2
      // Predicated region
      $region41: #{bottleneck_forward.4} parent=39 // pred_check
        %p1426 = pneg %p130
      $region42: #{bottleneck_forward.4} parent=39 // pred_check_branch
        %1428 = sbr.rel (%p1426) target = $region44
      $region43: #{bottleneck_forward.4} parent=39 // pred_region
        %s1429 = smul.u32 8, %s20
        %p1430 = scmp.lt.s32.totalorder %s1429, 15
        %s1431 = scalar_select %p1430, %s1429, 15
        %p1432 = scmp.lt.s32.totalorder %s21, 0
        %s1433 = scalar_select %p1432, %s21, 0
        %s1434 = sadd.s32 %s1433, %s1431
        %s1435 = smul.addr %s1434, 4
        %s1436 = scalar_lea.vmem %s3, %s1435
      $region44: #{bottleneck_forward.4} parent=39 // pred_fallthru
        _
    $region40: #{bottleneck_forward.4} parent=5 // pred_fallthru
      _
  $region6: #{bottleneck_forward.4} parent=0 // loop_footer
    %s13 = sadd.s32 1, %s9
  $region7: #{bottleneck_forward.4} parent=0 // loop_footer_branch
    %8 = sbr.rel target = $region3
  $region8: #{bottleneck_forward.4} parent=0 // loop_exit
    _

</llo_original>
